<compile_context>
chip_gen: v7x
topology: tpu7x:2x2x1
jax: 0.10.0
libtpu: 0.0.40
codegen_flags: <defaults>
</compile_context>

<pallas_src>
import numpy as np
import jax
import jax.numpy as jnp
from jax.experimental import pallas as pl
from jax.experimental.pallas import tpu as pltpu

EPS = 1e-5   # nn.BatchNorm1d default eps
LANE = 128


def _make_fused_kernel(num_layers, m_real):
    """Build the fused kernel body. `m_real` = number of real (unpadded) tokens."""

    def kernel(*refs):
        x_ref = refs[0]
        o_ref = refs[-1]
        p_refs = refs[1:-1]          # num_layers * (gamma, beta, W, b)

        a = x_ref[...]               # (C0, Mp) f32; padded token columns are 0
        mp = a.shape[1]
        inv_m = jnp.float32(1.0 / m_real)
        needs_mask = mp != m_real
        if needs_mask:
            lane_ids = jax.lax.broadcasted_iota(jnp.int32, (1, mp), 1)
            lane_mask = lane_ids < m_real

        for l in range(num_layers):
            g_ref, beta_ref, w_ref, b_ref = p_refs[4 * l: 4 * l + 4]

            # ELU (alpha=1), same values as func.elu_.  Padded columns: ELU(0) = 0.
            # (exp(x) of the unselected positive branch is discarded by the select.)
            a = jnp.where(a > 0, a, jnp.exp(a) - 1.0)

            # BatchNorm1d (training mode): one-pass batch stats over the token
            # (lane) axis.  Padded columns are exactly 0 -> contribute nothing;
            # divide by the real token count.
            mean = jnp.sum(a, axis=1, keepdims=True) * inv_m         # (Cin, 1)
            ex2 = jnp.sum(a * a, axis=1, keepdims=True) * inv_m      # (Cin, 1)
            var = jnp.maximum(ex2 - mean * mean, 0.0)

            # Fold BN into a single per-channel scale / shift.
            scale = g_ref[...] * jax.lax.rsqrt(var + EPS)            # (Cin, 1)
            shift = beta_ref[...] - mean * scale                     # (Cin, 1)
            y = a * scale + shift                                    # (Cin, Mp)

            # Conv1d(kernel_size=1) == channel matmul on the MXU + bias.
            a = jnp.dot(w_ref[...], y,
                        preferred_element_type=jnp.float32) + b_ref[...]   # (Cout, Mp)

            # Keep padded token columns exactly 0 so the next layer's stats are exact.
            if needs_mask and l < num_layers - 1:
                a = jnp.where(lane_mask, a, 0.0)

        o_ref[...] = a                                               # (Cout_last, Mp)

    return kernel


def secondary_mlp_pallas(x_ncl, params):
    """x_ncl: (N, C, L) like the PyTorch module. Returns (N, 8, L)."""
    N, C, L = x_ncl.shape
    M = N * L
    Mp = max(LANE, ((M + LANE - 1) // LANE) * LANE)

    # Channels-on-sublanes, tokens-on-lanes layout; padded token columns = 0.
    x_cm = jnp.transpose(x_ncl, (1, 0, 2)).reshape(C, M).astype(jnp.float32)
    x_cm = jnp.pad(x_cm, ((0, 0), (0, Mp - M)))

    flat = []
    for gamma, beta, w, b in params:
        flat += [
            gamma.reshape(-1, 1).astype(jnp.float32),     # (Cin, 1)
            beta.reshape(-1, 1).astype(jnp.float32),      # (Cin, 1)
            w[:, :, 0].astype(jnp.float32),               # torch (Cout,Cin,1) -> (Cout,Cin)
            b.reshape(-1, 1).astype(jnp.float32),         # (Cout, 1)
        ]
    cout_last = params[-1][2].shape[0]

    kernel = _make_fused_kernel(len(params), M)
    inputs = [x_cm] + flat
    out = pl.pallas_call(
        kernel,
        out_shape=jax.ShapeDtypeStruct((cout_last, Mp), jnp.float32),
        grid=(1,),
        in_specs=[pl.BlockSpec(a.shape, lambda i: (0, 0)) for a in inputs],
        out_specs=pl.BlockSpec((cout_last, Mp), lambda i: (0, 0)),
        compiler_params=pltpu.CompilerParams(
            dimension_semantics=("arbitrary",)),
    )(*inputs)

    out = out[:, :M].reshape(cout_last, N, L)
    return jnp.transpose(out, (1, 0, 2))                  # (N, 8, L)


def init_secondary_mlp_params(key, in_size, hidden_sizes=(64, 32, 16)):
    """Deterministic synthetic params matching the PyTorch module's shapes."""
    sizes = [in_size] + list(hidden_sizes) + [8]
    params = []
    for idx in range(len(sizes) - 1):
        cin, cout = sizes[idx], sizes[idx + 1]
        key, kw, kb = jax.random.split(key, 3)
        bound = 1.0 / np.sqrt(cin)
        # torch Conv1d weight shape (Cout, Cin, 1), bias (Cout,)
        w = jax.random.uniform(kw, (cout, cin, 1), jnp.float32, -bound, bound)
        b = jax.random.uniform(kb, (cout,), jnp.float32, -bound, bound)
        # torch BatchNorm1d default init: weight=1, bias=0
        gamma = jnp.ones((cin,), jnp.float32)
        beta = jnp.zeros((cin,), jnp.float32)
        params.append((gamma, beta, w, b))
    return params


def secondary_mlp_ref(x_ncl, params):
    """Pure-JAX reference of the PyTorch forward (training-mode BN, two-pass var)."""
    N, C, L = x_ncl.shape
    out = jnp.transpose(x_ncl, (0, 2, 1)).reshape(N * L, C)
    for gamma, beta, w, b in params:
        a = jnp.where(out > 0, out, jnp.exp(out) - 1.0)
        mean = jnp.mean(a, axis=0, keepdims=True)
        var = jnp.mean((a - mean) ** 2, axis=0, keepdims=True)
        y = (a - mean) / jnp.sqrt(var + EPS) * gamma[None, :] + beta[None, :]
        out = y @ jnp.transpose(w[:, :, 0]) + b[None, :]
    cout = out.shape[-1]
    return jnp.transpose(out.reshape(N, L, cout), (0, 2, 1))


if __name__ == "__main__":
    key = jax.random.PRNGKey(0)
    k_x, k_p = jax.random.split(key)

    N, C_IN, L = 2, 32, 16   # small shapes; in_size = 32
    x = jax.random.normal(k_x, (N, C_IN, L), jnp.float32)
    params = init_secondary_mlp_params(k_p, C_IN)

    out = jax.block_until_ready(secondary_mlp_pallas(x, params))
    ref = jax.block_until_ready(secondary_mlp_ref(x, params))

    assert out.shape == (N, 8, L), out.shape
    np.testing.assert_allclose(np.asarray(out), np.asarray(ref), rtol=1e-4, atol=1e-4)

    print("KERNEL_OK")
</pallas_src>

<mosaic_0001>
module attributes {stable_mosaic.version = 11 : i64} {
  func.func @kernel(%arg0: i32, %arg1: memref<32x128xf32, #tpu.memory_space<vmem>>, %arg2: memref<32x1xf32, #tpu.memory_space<vmem>>, %arg3: memref<32x1xf32, #tpu.memory_space<vmem>>, %arg4: memref<64x32xf32, #tpu.memory_space<vmem>>, %arg5: memref<64x1xf32, #tpu.memory_space<vmem>>, %arg6: memref<64x1xf32, #tpu.memory_space<vmem>>, %arg7: memref<64x1xf32, #tpu.memory_space<vmem>>, %arg8: memref<32x64xf32, #tpu.memory_space<vmem>>, %arg9: memref<32x1xf32, #tpu.memory_space<vmem>>, %arg10: memref<32x1xf32, #tpu.memory_space<vmem>>, %arg11: memref<32x1xf32, #tpu.memory_space<vmem>>, %arg12: memref<16x32xf32, #tpu.memory_space<vmem>>, %arg13: memref<16x1xf32, #tpu.memory_space<vmem>>, %arg14: memref<16x1xf32, #tpu.memory_space<vmem>>, %arg15: memref<16x1xf32, #tpu.memory_space<vmem>>, %arg16: memref<8x16xf32, #tpu.memory_space<vmem>>, %arg17: memref<8x1xf32, #tpu.memory_space<vmem>>, %arg18: memref<8x128xf32, #tpu.memory_space<vmem>>) attributes {dimension_semantics = [#tpu.dimension_semantics<arbitrary>], iteration_bounds = array<i64: 1>, scalar_prefetch = 0 : i64, scratch_operands = 0 : i64, tpu.core_type = #tpu.core_type<tc>, window_params = [{pipeline_mode = #tpu.pipeline_mode<synchronous>, transform_indices = @transform_0, window_bounds = array<i64: 32, 128>}, {pipeline_mode = #tpu.pipeline_mode<synchronous>, transform_indices = @transform_1, window_bounds = array<i64: 32, 1>}, {pipeline_mode = #tpu.pipeline_mode<synchronous>, transform_indices = @transform_2, window_bounds = array<i64: 32, 1>}, {pipeline_mode = #tpu.pipeline_mode<synchronous>, transform_indices = @transform_3, window_bounds = array<i64: 64, 32>}, {pipeline_mode = #tpu.pipeline_mode<synchronous>, transform_indices = @transform_4, window_bounds = array<i64: 64, 1>}, {pipeline_mode = #tpu.pipeline_mode<synchronous>, transform_indices = @transform_5, window_bounds = array<i64: 64, 1>}, {pipeline_mode = #tpu.pipeline_mode<synchronous>, transform_indices = @transform_6, window_bounds = array<i64: 64, 1>}, {pipeline_mode = #tpu.pipeline_mode<synchronous>, transform_indices = @transform_7, window_bounds = array<i64: 32, 64>}, {pipeline_mode = #tpu.pipeline_mode<synchronous>, transform_indices = @transform_8, window_bounds = array<i64: 32, 1>}, {pipeline_mode = #tpu.pipeline_mode<synchronous>, transform_indices = @transform_9, window_bounds = array<i64: 32, 1>}, {pipeline_mode = #tpu.pipeline_mode<synchronous>, transform_indices = @transform_10, window_bounds = array<i64: 32, 1>}, {pipeline_mode = #tpu.pipeline_mode<synchronous>, transform_indices = @transform_11, window_bounds = array<i64: 16, 32>}, {pipeline_mode = #tpu.pipeline_mode<synchronous>, transform_indices = @transform_12, window_bounds = array<i64: 16, 1>}, {pipeline_mode = #tpu.pipeline_mode<synchronous>, transform_indices = @transform_13, window_bounds = array<i64: 16, 1>}, {pipeline_mode = #tpu.pipeline_mode<synchronous>, transform_indices = @transform_14, window_bounds = array<i64: 16, 1>}, {pipeline_mode = #tpu.pipeline_mode<synchronous>, transform_indices = @transform_15, window_bounds = array<i64: 8, 16>}, {pipeline_mode = #tpu.pipeline_mode<synchronous>, transform_indices = @transform_16, window_bounds = array<i64: 8, 1>}, {pipeline_mode = #tpu.pipeline_mode<synchronous>, transform_indices = @transform_17, window_bounds = array<i64: 8, 128>}]} {
    %c0 = arith.constant 0 : index
    %c0_0 = arith.constant 0 : index
    %0 = vector.load %arg1[%c0, %c0_0] : memref<32x128xf32, #tpu.memory_space<vmem>>, vector<32x128xf32>
    %1 = tpu.iota {dimensions = array<i32: 1>} : vector<1x128xi32>
    %c32_i32 = arith.constant 32 : i32
    %2 = vector.broadcast %c32_i32 : i32 to vector<1x128xi32>
    %3 = arith.cmpi slt, %1, %2 : vector<1x128xi32>
    %cst = arith.constant 0.000000e+00 : f32
    %4 = vector.broadcast %cst : f32 to vector<32x128xf32>
    %5 = arith.cmpf ogt, %0, %4 : vector<32x128xf32>
    %6 = math.exp %0 : vector<32x128xf32>
    %cst_1 = arith.constant 1.000000e+00 : f32
    %7 = vector.broadcast %cst_1 : f32 to vector<32x128xf32>
    %8 = arith.subf %6, %7 : vector<32x128xf32>
    %9 = arith.select %5, %0, %8 : vector<32x128xi1>, vector<32x128xf32>
    %cst_2 = arith.constant dense<0.000000e+00> : vector<32xf32>
    %10 = vector.multi_reduction <add>, %9, %cst_2 [1] : vector<32x128xf32> to vector<32xf32>
    %11 = vector.shape_cast %10 : vector<32xf32> to vector<32x1xf32>
    %cst_3 = arith.constant 3.125000e-02 : f32
    %12 = vector.broadcast %cst_3 : f32 to vector<32x1xf32>
    %13 = arith.mulf %11, %12 : vector<32x1xf32>
    %14 = arith.mulf %9, %9 : vector<32x128xf32>
    %cst_4 = arith.constant dense<0.000000e+00> : vector<32xf32>
    %15 = vector.multi_reduction <add>, %14, %cst_4 [1] : vector<32x128xf32> to vector<32xf32>
    %16 = vector.shape_cast %15 : vector<32xf32> to vector<32x1xf32>
    %cst_5 = arith.constant 3.125000e-02 : f32
    %17 = vector.broadcast %cst_5 : f32 to vector<32x1xf32>
    %18 = arith.mulf %16, %17 : vector<32x1xf32>
    %19 = arith.mulf %13, %13 : vector<32x1xf32>
    %20 = arith.subf %18, %19 : vector<32x1xf32>
    %cst_6 = arith.constant 0.000000e+00 : f32
    %21 = vector.broadcast %cst_6 : f32 to vector<32x1xf32>
    %22 = arith.maximumf %20, %21 : vector<32x1xf32>
    %c0_7 = arith.constant 0 : index
    %c0_8 = arith.constant 0 : index
    %23 = vector.load %arg2[%c0_7, %c0_8] : memref<32x1xf32, #tpu.memory_space<vmem>>, vector<32x1xf32>
    %cst_9 = arith.constant 9.99999974E-6 : f32
    %24 = vector.broadcast %cst_9 : f32 to vector<32x1xf32>
    %25 = arith.addf %22, %24 : vector<32x1xf32>
    %26 = math.rsqrt %25 : vector<32x1xf32>
    %27 = arith.mulf %23, %26 : vector<32x1xf32>
    %c0_10 = arith.constant 0 : index
    %c0_11 = arith.constant 0 : index
    %28 = vector.load %arg3[%c0_10, %c0_11] : memref<32x1xf32, #tpu.memory_space<vmem>>, vector<32x1xf32>
    %29 = arith.mulf %13, %27 : vector<32x1xf32>
    %30 = arith.subf %28, %29 : vector<32x1xf32>
    %31 = vector.broadcast %27 : vector<32x1xf32> to vector<32x128xf32>
    %32 = arith.mulf %9, %31 : vector<32x128xf32>
    %33 = vector.broadcast %30 : vector<32x1xf32> to vector<32x128xf32>
    %34 = arith.addf %32, %33 : vector<32x128xf32>
    %c0_12 = arith.constant 0 : index
    %c0_13 = arith.constant 0 : index
    %35 = vector.load %arg4[%c0_12, %c0_13] : memref<64x32xf32, #tpu.memory_space<vmem>>, vector<64x32xf32>
    %cst_14 = arith.constant dense<0.000000e+00> : vector<64x128xf32>
    %36 = tpu.matmul %35, %34, %cst_14 {dimension_numbers = #tpu.dot_dimension_numbers<[1], [0], [0], [1], [0, 0, 1, 1], [], []>} : vector<64x32xf32>, vector<32x128xf32>, vector<64x128xf32> -> vector<64x128xf32>
    %c0_15 = arith.constant 0 : index
    %c0_16 = arith.constant 0 : index
    %37 = vector.load %arg5[%c0_15, %c0_16] : memref<64x1xf32, #tpu.memory_space<vmem>>, vector<64x1xf32>
    %38 = vector.broadcast %37 : vector<64x1xf32> to vector<64x128xf32>
    %39 = arith.addf %36, %38 : vector<64x128xf32>
    %cst_17 = arith.constant 0.000000e+00 : f32
    %40 = vector.shape_cast %3 : vector<1x128xi1> to vector<1x128xi1>
    %41 = vector.broadcast %40 : vector<1x128xi1> to vector<64x128xi1>
    %42 = vector.broadcast %cst_17 : f32 to vector<64x128xf32>
    %43 = arith.select %41, %39, %42 : vector<64x128xi1>, vector<64x128xf32>
    %cst_18 = arith.constant 0.000000e+00 : f32
    %44 = vector.broadcast %cst_18 : f32 to vector<64x128xf32>
    %45 = arith.cmpf ogt, %43, %44 : vector<64x128xf32>
    %46 = math.exp %43 : vector<64x128xf32>
    %cst_19 = arith.constant 1.000000e+00 : f32
    %47 = vector.broadcast %cst_19 : f32 to vector<64x128xf32>
    %48 = arith.subf %46, %47 : vector<64x128xf32>
    %49 = arith.select %45, %43, %48 : vector<64x128xi1>, vector<64x128xf32>
    %cst_20 = arith.constant dense<0.000000e+00> : vector<64xf32>
    %50 = vector.multi_reduction <add>, %49, %cst_20 [1] : vector<64x128xf32> to vector<64xf32>
    %51 = vector.shape_cast %50 : vector<64xf32> to vector<64x1xf32>
    %cst_21 = arith.constant 3.125000e-02 : f32
    %52 = vector.broadcast %cst_21 : f32 to vector<64x1xf32>
    %53 = arith.mulf %51, %52 : vector<64x1xf32>
    %54 = arith.mulf %49, %49 : vector<64x128xf32>
    %cst_22 = arith.constant dense<0.000000e+00> : vector<64xf32>
    %55 = vector.multi_reduction <add>, %54, %cst_22 [1] : vector<64x128xf32> to vector<64xf32>
    %56 = vector.shape_cast %55 : vector<64xf32> to vector<64x1xf32>
    %cst_23 = arith.constant 3.125000e-02 : f32
    %57 = vector.broadcast %cst_23 : f32 to vector<64x1xf32>
    %58 = arith.mulf %56, %57 : vector<64x1xf32>
    %59 = arith.mulf %53, %53 : vector<64x1xf32>
    %60 = arith.subf %58, %59 : vector<64x1xf32>
    %cst_24 = arith.constant 0.000000e+00 : f32
    %61 = vector.broadcast %cst_24 : f32 to vector<64x1xf32>
    %62 = arith.maximumf %60, %61 : vector<64x1xf32>
    %c0_25 = arith.constant 0 : index
    %c0_26 = arith.constant 0 : index
    %63 = vector.load %arg6[%c0_25, %c0_26] : memref<64x1xf32, #tpu.memory_space<vmem>>, vector<64x1xf32>
    %cst_27 = arith.constant 9.99999974E-6 : f32
    %64 = vector.broadcast %cst_27 : f32 to vector<64x1xf32>
    %65 = arith.addf %62, %64 : vector<64x1xf32>
    %66 = math.rsqrt %65 : vector<64x1xf32>
    %67 = arith.mulf %63, %66 : vector<64x1xf32>
    %c0_28 = arith.constant 0 : index
    %c0_29 = arith.constant 0 : index
    %68 = vector.load %arg7[%c0_28, %c0_29] : memref<64x1xf32, #tpu.memory_space<vmem>>, vector<64x1xf32>
    %69 = arith.mulf %53, %67 : vector<64x1xf32>
    %70 = arith.subf %68, %69 : vector<64x1xf32>
    %71 = vector.broadcast %67 : vector<64x1xf32> to vector<64x128xf32>
    %72 = arith.mulf %49, %71 : vector<64x128xf32>
    %73 = vector.broadcast %70 : vector<64x1xf32> to vector<64x128xf32>
    %74 = arith.addf %72, %73 : vector<64x128xf32>
    %c0_30 = arith.constant 0 : index
    %c0_31 = arith.constant 0 : index
    %75 = vector.load %arg8[%c0_30, %c0_31] : memref<32x64xf32, #tpu.memory_space<vmem>>, vector<32x64xf32>
    %cst_32 = arith.constant dense<0.000000e+00> : vector<32x128xf32>
    %76 = tpu.matmul %75, %74, %cst_32 {dimension_numbers = #tpu.dot_dimension_numbers<[1], [0], [0], [1], [0, 0, 1, 1], [], []>} : vector<32x64xf32>, vector<64x128xf32>, vector<32x128xf32> -> vector<32x128xf32>
    %c0_33 = arith.constant 0 : index
    %c0_34 = arith.constant 0 : index
    %77 = vector.load %arg9[%c0_33, %c0_34] : memref<32x1xf32, #tpu.memory_space<vmem>>, vector<32x1xf32>
    %78 = vector.broadcast %77 : vector<32x1xf32> to vector<32x128xf32>
    %79 = arith.addf %76, %78 : vector<32x128xf32>
    %cst_35 = arith.constant 0.000000e+00 : f32
    %80 = vector.shape_cast %3 : vector<1x128xi1> to vector<1x128xi1>
    %81 = vector.broadcast %80 : vector<1x128xi1> to vector<32x128xi1>
    %82 = vector.broadcast %cst_35 : f32 to vector<32x128xf32>
    %83 = arith.select %81, %79, %82 : vector<32x128xi1>, vector<32x128xf32>
    %cst_36 = arith.constant 0.000000e+00 : f32
    %84 = vector.broadcast %cst_36 : f32 to vector<32x128xf32>
    %85 = arith.cmpf ogt, %83, %84 : vector<32x128xf32>
    %86 = math.exp %83 : vector<32x128xf32>
    %cst_37 = arith.constant 1.000000e+00 : f32
    %87 = vector.broadcast %cst_37 : f32 to vector<32x128xf32>
    %88 = arith.subf %86, %87 : vector<32x128xf32>
    %89 = arith.select %85, %83, %88 : vector<32x128xi1>, vector<32x128xf32>
    %cst_38 = arith.constant dense<0.000000e+00> : vector<32xf32>
    %90 = vector.multi_reduction <add>, %89, %cst_38 [1] : vector<32x128xf32> to vector<32xf32>
    %91 = vector.shape_cast %90 : vector<32xf32> to vector<32x1xf32>
    %cst_39 = arith.constant 3.125000e-02 : f32
    %92 = vector.broadcast %cst_39 : f32 to vector<32x1xf32>
    %93 = arith.mulf %91, %92 : vector<32x1xf32>
    %94 = arith.mulf %89, %89 : vector<32x128xf32>
    %cst_40 = arith.constant dense<0.000000e+00> : vector<32xf32>
    %95 = vector.multi_reduction <add>, %94, %cst_40 [1] : vector<32x128xf32> to vector<32xf32>
    %96 = vector.shape_cast %95 : vector<32xf32> to vector<32x1xf32>
    %cst_41 = arith.constant 3.125000e-02 : f32
    %97 = vector.broadcast %cst_41 : f32 to vector<32x1xf32>
    %98 = arith.mulf %96, %97 : vector<32x1xf32>
    %99 = arith.mulf %93, %93 : vector<32x1xf32>
    %100 = arith.subf %98, %99 : vector<32x1xf32>
    %cst_42 = arith.constant 0.000000e+00 : f32
    %101 = vector.broadcast %cst_42 : f32 to vector<32x1xf32>
    %102 = arith.maximumf %100, %101 : vector<32x1xf32>
    %c0_43 = arith.constant 0 : index
    %c0_44 = arith.constant 0 : index
    %103 = vector.load %arg10[%c0_43, %c0_44] : memref<32x1xf32, #tpu.memory_space<vmem>>, vector<32x1xf32>
    %cst_45 = arith.constant 9.99999974E-6 : f32
    %104 = vector.broadcast %cst_45 : f32 to vector<32x1xf32>
    %105 = arith.addf %102, %104 : vector<32x1xf32>
    %106 = math.rsqrt %105 : vector<32x1xf32>
    %107 = arith.mulf %103, %106 : vector<32x1xf32>
    %c0_46 = arith.constant 0 : index
    %c0_47 = arith.constant 0 : index
    %108 = vector.load %arg11[%c0_46, %c0_47] : memref<32x1xf32, #tpu.memory_space<vmem>>, vector<32x1xf32>
    %109 = arith.mulf %93, %107 : vector<32x1xf32>
    %110 = arith.subf %108, %109 : vector<32x1xf32>
    %111 = vector.broadcast %107 : vector<32x1xf32> to vector<32x128xf32>
    %112 = arith.mulf %89, %111 : vector<32x128xf32>
    %113 = vector.broadcast %110 : vector<32x1xf32> to vector<32x128xf32>
    %114 = arith.addf %112, %113 : vector<32x128xf32>
    %c0_48 = arith.constant 0 : index
    %c0_49 = arith.constant 0 : index
    %115 = vector.load %arg12[%c0_48, %c0_49] : memref<16x32xf32, #tpu.memory_space<vmem>>, vector<16x32xf32>
    %cst_50 = arith.constant dense<0.000000e+00> : vector<16x128xf32>
    %116 = tpu.matmul %115, %114, %cst_50 {dimension_numbers = #tpu.dot_dimension_numbers<[1], [0], [0], [1], [0, 0, 1, 1], [], []>} : vector<16x32xf32>, vector<32x128xf32>, vector<16x128xf32> -> vector<16x128xf32>
    %c0_51 = arith.constant 0 : index
    %c0_52 = arith.constant 0 : index
    %117 = vector.load %arg13[%c0_51, %c0_52] : memref<16x1xf32, #tpu.memory_space<vmem>>, vector<16x1xf32>
    %118 = vector.broadcast %117 : vector<16x1xf32> to vector<16x128xf32>
    %119 = arith.addf %116, %118 : vector<16x128xf32>
    %cst_53 = arith.constant 0.000000e+00 : f32
    %120 = vector.shape_cast %3 : vector<1x128xi1> to vector<1x128xi1>
    %121 = vector.broadcast %120 : vector<1x128xi1> to vector<16x128xi1>
    %122 = vector.broadcast %cst_53 : f32 to vector<16x128xf32>
    %123 = arith.select %121, %119, %122 : vector<16x128xi1>, vector<16x128xf32>
    %cst_54 = arith.constant 0.000000e+00 : f32
    %124 = vector.broadcast %cst_54 : f32 to vector<16x128xf32>
    %125 = arith.cmpf ogt, %123, %124 : vector<16x128xf32>
    %126 = math.exp %123 : vector<16x128xf32>
    %cst_55 = arith.constant 1.000000e+00 : f32
    %127 = vector.broadcast %cst_55 : f32 to vector<16x128xf32>
    %128 = arith.subf %126, %127 : vector<16x128xf32>
    %129 = arith.select %125, %123, %128 : vector<16x128xi1>, vector<16x128xf32>
    %cst_56 = arith.constant dense<0.000000e+00> : vector<16xf32>
    %130 = vector.multi_reduction <add>, %129, %cst_56 [1] : vector<16x128xf32> to vector<16xf32>
    %131 = vector.shape_cast %130 : vector<16xf32> to vector<16x1xf32>
    %cst_57 = arith.constant 3.125000e-02 : f32
    %132 = vector.broadcast %cst_57 : f32 to vector<16x1xf32>
    %133 = arith.mulf %131, %132 : vector<16x1xf32>
    %134 = arith.mulf %129, %129 : vector<16x128xf32>
    %cst_58 = arith.constant dense<0.000000e+00> : vector<16xf32>
    %135 = vector.multi_reduction <add>, %134, %cst_58 [1] : vector<16x128xf32> to vector<16xf32>
    %136 = vector.shape_cast %135 : vector<16xf32> to vector<16x1xf32>
    %cst_59 = arith.constant 3.125000e-02 : f32
    %137 = vector.broadcast %cst_59 : f32 to vector<16x1xf32>
    %138 = arith.mulf %136, %137 : vector<16x1xf32>
    %139 = arith.mulf %133, %133 : vector<16x1xf32>
    %140 = arith.subf %138, %139 : vector<16x1xf32>
    %cst_60 = arith.constant 0.000000e+00 : f32
    %141 = vector.broadcast %cst_60 : f32 to vector<16x1xf32>
    %142 = arith.maximumf %140, %141 : vector<16x1xf32>
    %c0_61 = arith.constant 0 : index
    %c0_62 = arith.constant 0 : index
    %143 = vector.load %arg14[%c0_61, %c0_62] : memref<16x1xf32, #tpu.memory_space<vmem>>, vector<16x1xf32>
    %cst_63 = arith.constant 9.99999974E-6 : f32
    %144 = vector.broadcast %cst_63 : f32 to vector<16x1xf32>
    %145 = arith.addf %142, %144 : vector<16x1xf32>
    %146 = math.rsqrt %145 : vector<16x1xf32>
    %147 = arith.mulf %143, %146 : vector<16x1xf32>
    %c0_64 = arith.constant 0 : index
    %c0_65 = arith.constant 0 : index
    %148 = vector.load %arg15[%c0_64, %c0_65] : memref<16x1xf32, #tpu.memory_space<vmem>>, vector<16x1xf32>
    %149 = arith.mulf %133, %147 : vector<16x1xf32>
    %150 = arith.subf %148, %149 : vector<16x1xf32>
    %151 = vector.broadcast %147 : vector<16x1xf32> to vector<16x128xf32>
    %152 = arith.mulf %129, %151 : vector<16x128xf32>
    %153 = vector.broadcast %150 : vector<16x1xf32> to vector<16x128xf32>
    %154 = arith.addf %152, %153 : vector<16x128xf32>
    %c0_66 = arith.constant 0 : index
    %c0_67 = arith.constant 0 : index
    %155 = vector.load %arg16[%c0_66, %c0_67] : memref<8x16xf32, #tpu.memory_space<vmem>>, vector<8x16xf32>
    %cst_68 = arith.constant dense<0.000000e+00> : vector<8x128xf32>
    %156 = tpu.matmul %155, %154, %cst_68 {dimension_numbers = #tpu.dot_dimension_numbers<[1], [0], [0], [1], [0, 0, 1, 1], [], []>} : vector<8x16xf32>, vector<16x128xf32>, vector<8x128xf32> -> vector<8x128xf32>
    %c0_69 = arith.constant 0 : index
    %c0_70 = arith.constant 0 : index
    %157 = vector.load %arg17[%c0_69, %c0_70] : memref<8x1xf32, #tpu.memory_space<vmem>>, vector<8x1xf32>
    %158 = vector.broadcast %157 : vector<8x1xf32> to vector<8x128xf32>
    %159 = arith.addf %156, %158 : vector<8x128xf32>
    %c0_71 = arith.constant 0 : index
    %c0_72 = arith.constant 0 : index
    %160 = vector.load %arg18[%c0_71, %c0_72] : memref<8x128xf32, #tpu.memory_space<vmem>>, vector<8x128xf32>
    tpu.vector_store %arg18[%c0_71, %c0_72], %159 {strides = array<i32>} : memref<8x128xf32, #tpu.memory_space<vmem>>, vector<8x128xf32>,
    return
  }
  func.func @transform_0(%arg0: i32) -> (i32, i32) {
    %c0_i32 = arith.constant 0 : i32
    %c0_i32_0 = arith.constant 0 : i32
    %c0_i32_1 = arith.constant 0 : i32
    return %c0_i32, %c0_i32_0 : i32, i32
  }
  func.func @transform_1(%arg0: i32) -> (i32, i32) {
    %c0_i32 = arith.constant 0 : i32
    %c0_i32_0 = arith.constant 0 : i32
    %c0_i32_1 = arith.constant 0 : i32
    return %c0_i32, %c0_i32_0 : i32, i32
  }
  func.func @transform_2(%arg0: i32) -> (i32, i32) {
    %c0_i32 = arith.constant 0 : i32
    %c0_i32_0 = arith.constant 0 : i32
    %c0_i32_1 = arith.constant 0 : i32
    return %c0_i32, %c0_i32_0 : i32, i32
  }
  func.func @transform_3(%arg0: i32) -> (i32, i32) {
    %c0_i32 = arith.constant 0 : i32
    %c0_i32_0 = arith.constant 0 : i32
    %c0_i32_1 = arith.constant 0 : i32
    return %c0_i32, %c0_i32_0 : i32, i32
  }
  func.func @transform_4(%arg0: i32) -> (i32, i32) {
    %c0_i32 = arith.constant 0 : i32
    %c0_i32_0 = arith.constant 0 : i32
    %c0_i32_1 = arith.constant 0 : i32
    return %c0_i32, %c0_i32_0 : i32, i32
  }
  func.func @transform_5(%arg0: i32) -> (i32, i32) {
    %c0_i32 = arith.constant 0 : i32
    %c0_i32_0 = arith.constant 0 : i32
    %c0_i32_1 = arith.constant 0 : i32
    return %c0_i32, %c0_i32_0 : i32, i32
  }
  func.func @transform_6(%arg0: i32) -> (i32, i32) {
    %c0_i32 = arith.constant 0 : i32
    %c0_i32_0 = arith.constant 0 : i32
    %c0_i32_1 = arith.constant 0 : i32
    return %c0_i32, %c0_i32_0 : i32, i32
  }
  func.func @transform_7(%arg0: i32) -> (i32, i32) {
    %c0_i32 = arith.constant 0 : i32
    %c0_i32_0 = arith.constant 0 : i32
    %c0_i32_1 = arith.constant 0 : i32
    return %c0_i32, %c0_i32_0 : i32, i32
  }
  func.func @transform_8(%arg0: i32) -> (i32, i32) {
    %c0_i32 = arith.constant 0 : i32
    %c0_i32_0 = arith.constant 0 : i32
    %c0_i32_1 = arith.constant 0 : i32
    return %c0_i32, %c0_i32_0 : i32, i32
  }
  func.func @transform_9(%arg0: i32) -> (i32, i32) {
    %c0_i32 = arith.constant 0 : i32
    %c0_i32_0 = arith.constant 0 : i32
    %c0_i32_1 = arith.constant 0 : i32
    return %c0_i32, %c0_i32_0 : i32, i32
  }
  func.func @transform_10(%arg0: i32) -> (i32, i32) {
    %c0_i32 = arith.constant 0 : i32
    %c0_i32_0 = arith.constant 0 : i32
    %c0_i32_1 = arith.constant 0 : i32
    return %c0_i32, %c0_i32_0 : i32, i32
  }
  func.func @transform_11(%arg0: i32) -> (i32, i32) {
    %c0_i32 = arith.constant 0 : i32
    %c0_i32_0 = arith.constant 0 : i32
    %c0_i32_1 = arith.constant 0 : i32
    return %c0_i32, %c0_i32_0 : i32, i32
  }
  func.func @transform_12(%arg0: i32) -> (i32, i32) {
    %c0_i32 = arith.constant 0 : i32
    %c0_i32_0 = arith.constant 0 : i32
    %c0_i32_1 = arith.constant 0 : i32
    return %c0_i32, %c0_i32_0 : i32, i32
  }
  func.func @transform_13(%arg0: i32) -> (i32, i32) {
    %c0_i32 = arith.constant 0 : i32
    %c0_i32_0 = arith.constant 0 : i32
    %c0_i32_1 = arith.constant 0 : i32
    return %c0_i32, %c0_i32_0 : i32, i32
  }
  func.func @transform_14(%arg0: i32) -> (i32, i32) {
    %c0_i32 = arith.constant 0 : i32
    %c0_i32_0 = arith.constant 0 : i32
    %c0_i32_1 = arith.constant 0 : i32
    return %c0_i32, %c0_i32_0 : i32, i32
  }
  func.func @transform_15(%arg0: i32) -> (i32, i32) {
    %c0_i32 = arith.constant 0 : i32
    %c0_i32_0 = arith.constant 0 : i32
    %c0_i32_1 = arith.constant 0 : i32
    return %c0_i32, %c0_i32_0 : i32, i32
  }
  func.func @transform_16(%arg0: i32) -> (i32, i32) {
    %c0_i32 = arith.constant 0 : i32
    %c0_i32_0 = arith.constant 0 : i32
    %c0_i32_1 = arith.constant 0 : i32
    return %c0_i32, %c0_i32_0 : i32, i32
  }
  func.func @transform_17(%arg0: i32) -> (i32, i32) {
    %c0_i32 = arith.constant 0 : i32
    %c0_i32_0 = arith.constant 0 : i32
    %c0_i32_1 = arith.constant 0 : i32
    return %c0_i32, %c0_i32_0 : i32, i32
  }
}

</mosaic_0001>

<llo_original>
// kernel: tpu_custom_call.1
$region0: #{tpu_custom_call.1}
  #allocation0 [shape = 'u32[]', space=smem, size = 0x4, offset = 0x4, fixed_abs, tag = 'smem constant byte address 0x4 - core index']
  #allocation1 [shape = 'u32[144,128]{1,0:T(1,128)}', space=vmem, size = 0x12000, scoped, tag = 'internal scratch']
  %s0 = inlined_call_operand.vmem [shape: f32[32,128], index: 0, kind: input, shape index: {}]
  %s1 = inlined_call_operand.vmem [shape: f32[32,1], index: 1, kind: input, shape index: {}]
  %s2 = inlined_call_operand.vmem [shape: f32[32,1], index: 2, kind: input, shape index: {}]
  %s3 = inlined_call_operand.vmem [shape: f32[64,32], index: 3, kind: input, shape index: {}]
  %s4 = inlined_call_operand.vmem [shape: f32[64,1], index: 4, kind: input, shape index: {}]
  %s5 = inlined_call_operand.vmem [shape: f32[64,1], index: 5, kind: input, shape index: {}]
  %s6 = inlined_call_operand.vmem [shape: f32[64,1], index: 6, kind: input, shape index: {}]
  %s7 = inlined_call_operand.vmem [shape: f32[32,64], index: 7, kind: input, shape index: {}]
  %s8 = inlined_call_operand.vmem [shape: f32[32,1], index: 8, kind: input, shape index: {}]
  %s9 = inlined_call_operand.vmem [shape: f32[32,1], index: 9, kind: input, shape index: {}]
  %s10 = inlined_call_operand.vmem [shape: f32[32,1], index: 10, kind: input, shape index: {}]
  %s11 = inlined_call_operand.vmem [shape: f32[16,32], index: 11, kind: input, shape index: {}]
  %s12 = inlined_call_operand.vmem [shape: f32[16,1], index: 12, kind: input, shape index: {}]
  %s13 = inlined_call_operand.vmem [shape: f32[16,1], index: 13, kind: input, shape index: {}]
  %s14 = inlined_call_operand.vmem [shape: f32[16,1], index: 14, kind: input, shape index: {}]
  %s15 = inlined_call_operand.vmem [shape: f32[8,16], index: 15, kind: input, shape index: {}]
  %s16 = inlined_call_operand.vmem [shape: f32[8,1], index: 16, kind: input, shape index: {}]
  %s17 = inlined_call_operand.hbm [shape: f32[8,128], index: 17, kind: output, shape index: {}]
  %s18 = sld [smem:[#allocation0]]
  $region78: #{tpu_custom_call.1} parent=0
    _
  %s20 = ssub.s32 1, %s18
  %s21 = scalar_select 0, %s20, %s18
  $region1: #{tpu_custom_call.1} parent=0
    #allocation2 [shape = 'u8[4096]{0}', space=vmem, size = 0x1000, scoped, tag = 'output window, operand 0, single buffered']
    #allocation3 [shape = 's32[1]{0}', space=sflag, size = 0x4, scoped, tag = 'scoped memory for tpu_custom_call.1']
    %22 = vsyncpa [#allocation3], 0
    // Predicated region
    $region2: #{tpu_custom_call.1} parent=1 // pred_check
      _
    $region3: #{tpu_custom_call.1} parent=1 // pred_check_branch
      %24 = sbr.rel (0) target = $region5
    $region4: #{tpu_custom_call.1} parent=1 // pred_region
      _
    $region5: #{tpu_custom_call.1} parent=1 // pred_fallthru
      _
    // Predicated region
    $region6: #{tpu_custom_call.1} parent=1 // pred_check
      _
    $region7: #{tpu_custom_call.1} parent=1 // pred_check_branch
      %26 = sbr.rel (0) target = $region9
    $region8: #{tpu_custom_call.1} parent=1 // pred_region
      _
    $region9: #{tpu_custom_call.1} parent=1 // pred_fallthru
      _
    // Predicated region
    $region10: #{tpu_custom_call.1} parent=1 // pred_check
      _
    $region11: #{tpu_custom_call.1} parent=1 // pred_check_branch
      %28 = sbr.rel (0) target = $region13
    $region12: #{tpu_custom_call.1} parent=1 // pred_region
      _
    $region13: #{tpu_custom_call.1} parent=1 // pred_fallthru
      _
    // Predicated region
    $region14: #{tpu_custom_call.1} parent=1 // pred_check
      _
    $region15: #{tpu_custom_call.1} parent=1 // pred_check_branch
      %30 = sbr.rel (0) target = $region17
    $region16: #{tpu_custom_call.1} parent=1 // pred_region
      _
    $region17: #{tpu_custom_call.1} parent=1 // pred_fallthru
      _
    // Predicated region
    $region18: #{tpu_custom_call.1} parent=1 // pred_check
      _
    $region19: #{tpu_custom_call.1} parent=1 // pred_check_branch
      %32 = sbr.rel (0) target = $region21
    $region20: #{tpu_custom_call.1} parent=1 // pred_region
      _
    $region21: #{tpu_custom_call.1} parent=1 // pred_fallthru
      _
    // Predicated region
    $region22: #{tpu_custom_call.1} parent=1 // pred_check
      _
    $region23: #{tpu_custom_call.1} parent=1 // pred_check_branch
      %34 = sbr.rel (0) target = $region25
    $region24: #{tpu_custom_call.1} parent=1 // pred_region
      _
    $region25: #{tpu_custom_call.1} parent=1 // pred_fallthru
      _
    // Predicated region
    $region26: #{tpu_custom_call.1} parent=1 // pred_check
      _
    $region27: #{tpu_custom_call.1} parent=1 // pred_check_branch
      %36 = sbr.rel (0) target = $region29
    $region28: #{tpu_custom_call.1} parent=1 // pred_region
      _
    $region29: #{tpu_custom_call.1} parent=1 // pred_fallthru
      _
    // Predicated region
    $region30: #{tpu_custom_call.1} parent=1 // pred_check
      _
    $region31: #{tpu_custom_call.1} parent=1 // pred_check_branch
      %38 = sbr.rel (0) target = $region33
    $region32: #{tpu_custom_call.1} parent=1 // pred_region
      _
    $region33: #{tpu_custom_call.1} parent=1 // pred_fallthru
      _
    // Predicated region
    $region34: #{tpu_custom_call.1} parent=1 // pred_check
      _
    $region35: #{tpu_custom_call.1} parent=1 // pred_check_branch
      %40 = sbr.rel (0) target = $region37
    $region36: #{tpu_custom_call.1} parent=1 // pred_region
      _
    $region37: #{tpu_custom_call.1} parent=1 // pred_fallthru
      _
    // Predicated region
    $region38: #{tpu_custom_call.1} parent=1 // pred_check
      _
    $region39: #{tpu_custom_call.1} parent=1 // pred_check_branch
      %42 = sbr.rel (0) target = $region41
    $region40: #{tpu_custom_call.1} parent=1 // pred_region
      _
    $region41: #{tpu_custom_call.1} parent=1 // pred_fallthru
      _
    // Predicated region
    $region42: #{tpu_custom_call.1} parent=1 // pred_check
      _
    $region43: #{tpu_custom_call.1} parent=1 // pred_check_branch
      %44 = sbr.rel (0) target = $region45
    $region44: #{tpu_custom_call.1} parent=1 // pred_region
      _
    $region45: #{tpu_custom_call.1} parent=1 // pred_fallthru
      _
    // Predicated region
    $region46: #{tpu_custom_call.1} parent=1 // pred_check
      _
    $region47: #{tpu_custom_call.1} parent=1 // pred_check_branch
      %46 = sbr.rel (0) target = $region49
    $region48: #{tpu_custom_call.1} parent=1 // pred_region
      _
    $region49: #{tpu_custom_call.1} parent=1 // pred_fallthru
      _
    // Predicated region
    $region50: #{tpu_custom_call.1} parent=1 // pred_check
      _
    $region51: #{tpu_custom_call.1} parent=1 // pred_check_branch
      %48 = sbr.rel (0) target = $region53
    $region52: #{tpu_custom_call.1} parent=1 // pred_region
      _
    $region53: #{tpu_custom_call.1} parent=1 // pred_fallthru
      _
    // Predicated region
    $region54: #{tpu_custom_call.1} parent=1 // pred_check
      _
    $region55: #{tpu_custom_call.1} parent=1 // pred_check_branch
      %50 = sbr.rel (0) target = $region57
    $region56: #{tpu_custom_call.1} parent=1 // pred_region
      _
    $region57: #{tpu_custom_call.1} parent=1 // pred_fallthru
      _
    // Predicated region
    $region58: #{tpu_custom_call.1} parent=1 // pred_check
      _
    $region59: #{tpu_custom_call.1} parent=1 // pred_check_branch
      %52 = sbr.rel (0) target = $region61
    $region60: #{tpu_custom_call.1} parent=1 // pred_region
      _
    $region61: #{tpu_custom_call.1} parent=1 // pred_fallthru
      _
    // Predicated region
    $region62: #{tpu_custom_call.1} parent=1 // pred_check
      _
    $region63: #{tpu_custom_call.1} parent=1 // pred_check_branch
      %54 = sbr.rel (0) target = $region65
    $region64: #{tpu_custom_call.1} parent=1 // pred_region
      _
    $region65: #{tpu_custom_call.1} parent=1 // pred_fallthru
      _
    // Predicated region
    $region66: #{tpu_custom_call.1} parent=1 // pred_check
      _
    $region67: #{tpu_custom_call.1} parent=1 // pred_check_branch
      %56 = sbr.rel (0) target = $region69
    $region68: #{tpu_custom_call.1} parent=1 // pred_region
      _
    $region69: #{tpu_custom_call.1} parent=1 // pred_fallthru
      _
    %v57 = vld [vmem:[%s0] sm:$0xff]
    %v58 = vld [vmem:[%s0 + $0x8] sm:$0xff]
    %v59 = vld [vmem:[%s0 + $0x10] sm:$0xff]
    %v60 = vld [vmem:[%s0 + $0x18] sm:$0xff]
    %v61 = vlaneseq
    %v62 = vand.u32 %v61, 127
    %vm63 = vcmp.lt.s32.totalorder %v62, 32
    %vm64 = vcmp.gt.f32.partialorder %v57, 0.0
    %vm65 = vcmp.gt.f32.partialorder %v58, 0.0
    %vm66 = vcmp.gt.f32.partialorder %v59, 0.0
    %vm67 = vcmp.gt.f32.partialorder %v60, 0.0
    %v68 = vmul.f32 %v57, 1.442695
    %v69 = vpow.pop %v68
    %v70 = vmul.f32 %v58, 1.442695
    %v71 = vpow.pop %v70
    %v72 = vmul.f32 %v59, 1.442695
    %v73 = vpow.pop %v72
    %v74 = vmul.f32 %v60, 1.442695
    %v75 = vpow.pop %v74
    %v76 = vsub.f32 %v69, 1.0
    %v77 = vsub.f32 %v71, 1.0
    %v78 = vsub.f32 %v73, 1.0
    %v79 = vsub.f32 %v75, 1.0
    %v80 = vsel %vm64, %v57, %v76
    %v81 = vsel %vm65, %v58, %v77
    %v82 = vsel %vm66, %v59, %v78
    %v83 = vsel %vm67, %v60, %v79
    %84 = vadd.xlane.f32.xlu0 %v80
    %v85 = vpop.xlane.xlu0 %84
    %86 = vadd.xlane.f32.xlu0 %v81
    %v87 = vpop.xlane.xlu0 %86
    %88 = vadd.xlane.f32.xlu0 %v82
    %v89 = vpop.xlane.xlu0 %88
    %90 = vadd.xlane.f32.xlu0 %v83
    %v91 = vpop.xlane.xlu0 %90
    %v92 = vmul.f32 %v85, 0.03125
    %v93 = vmul.f32 %v87, 0.03125
    %v94 = vmul.f32 %v89, 0.03125
    %v95 = vmul.f32 %v91, 0.03125
    %v96 = vmul.f32 %v80, %v80
    %v97 = vmul.f32 %v81, %v81
    %v98 = vmul.f32 %v82, %v82
    %v99 = vmul.f32 %v83, %v83
    %100 = vadd.xlane.f32.xlu0 %v96
    %v101 = vpop.xlane.xlu0 %100
    %102 = vadd.xlane.f32.xlu0 %v97
    %v103 = vpop.xlane.xlu0 %102
    %104 = vadd.xlane.f32.xlu0 %v98
    %v105 = vpop.xlane.xlu0 %104
    %106 = vadd.xlane.f32.xlu0 %v99
    %v107 = vpop.xlane.xlu0 %106
    %v108 = vmul.f32 %v101, 0.03125
    %v109 = vmul.f32 %v103, 0.03125
    %v110 = vmul.f32 %v105, 0.03125
    %v111 = vmul.f32 %v107, 0.03125
    %v112 = vmul.f32 %v92, %v92
    %v113 = vmul.f32 %v93, %v93
    %v114 = vmul.f32 %v94, %v94
    %v115 = vmul.f32 %v95, %v95
    %v116 = vsub.f32 %v108, %v112
    %v117 = vsub.f32 %v109, %v113
    %v118 = vsub.f32 %v110, %v114
    %v119 = vsub.f32 %v111, %v115
    %v120 = vmax.f32 %v116, 0.0
    %v121 = vmax.f32 %v117, 0.0
    %v122 = vmax.f32 %v118, 0.0
    %v123 = vmax.f32 %v119, 0.0
    %v124 = vld [vmem:[%s1] sm:$0xff]
    %v125 = vld [vmem:[%s1 + $0x8] sm:$0xff]
    %v126 = vld [vmem:[%s1 + $0x10] sm:$0xff]
    %v127 = vld [vmem:[%s1 + $0x18] sm:$0xff]
    %v128 = vadd.f32 %v120, 1e-05
    %v129 = vadd.f32 %v121, 1e-05
    %v130 = vadd.f32 %v122, 1e-05
    %v131 = vadd.f32 %v123, 1e-05
    %v132 = vrsqrt.pop %v128
    %v133 = vrsqrt.pop %v129
    %v134 = vrsqrt.pop %v130
    %v135 = vrsqrt.pop %v131
    %v136 = vmul.f32 %v124, %v132
    %v137 = vmul.f32 %v125, %v133
    %v138 = vmul.f32 %v126, %v134
    %v139 = vmul.f32 %v127, %v135
    %v140 = vld [vmem:[%s2] sm:$0xff]
    %v141 = vld [vmem:[%s2 + $0x8] sm:$0xff]
    %v142 = vld [vmem:[%s2 + $0x10] sm:$0xff]
    %v143 = vld [vmem:[%s2 + $0x18] sm:$0xff]
    %v144 = vmul.f32 %v92, %v136
    %v145 = vmul.f32 %v93, %v137
    %v146 = vmul.f32 %v94, %v138
    %v147 = vmul.f32 %v95, %v139
    %v148 = vsub.f32 %v140, %v144
    %v149 = vsub.f32 %v141, %v145
    %v150 = vsub.f32 %v142, %v146
    %v151 = vsub.f32 %v143, %v147
    %153 = vset.pattern.permute.xlu0 0
    %154 = vperm.xlu0 %153, %v136
    %v155 = vpop.permute.xlu0 %154
    %158 = vset.pattern.permute.xlu0 0
    %159 = vperm.xlu0 %158, %v137
    %v160 = vpop.permute.xlu0 %159
    %163 = vset.pattern.permute.xlu0 0
    %164 = vperm.xlu0 %163, %v138
    %v165 = vpop.permute.xlu0 %164
    %168 = vset.pattern.permute.xlu0 0
    %169 = vperm.xlu0 %168, %v139
    %v170 = vpop.permute.xlu0 %169
    %v172 = vmul.f32 %v80, %v155
    %v173 = vmul.f32 %v81, %v160
    %v174 = vmul.f32 %v82, %v165
    %v175 = vmul.f32 %v83, %v170
    %177 = vset.pattern.permute.xlu0 0
    %178 = vperm.xlu0 %177, %v148
    %v179 = vpop.permute.xlu0 %178
    %182 = vset.pattern.permute.xlu0 0
    %183 = vperm.xlu0 %182, %v149
    %v184 = vpop.permute.xlu0 %183
    %187 = vset.pattern.permute.xlu0 0
    %188 = vperm.xlu0 %187, %v150
    %v189 = vpop.permute.xlu0 %188
    %192 = vset.pattern.permute.xlu0 0
    %193 = vperm.xlu0 %192, %v151
    %v194 = vpop.permute.xlu0 %193
    %v196 = vadd.f32 %v172, %v179
    %v197 = vadd.f32 %v173, %v184
    %v198 = vadd.f32 %v174, %v189
    %v199 = vadd.f32 %v175, %v194
    %v200 = vld [vmem:[%s3] sm:$0xff]
    %v201 = vld [vmem:[%s3 + $0x8] sm:$0xff]
    %v202 = vld [vmem:[%s3 + $0x10] sm:$0xff]
    %v203 = vld [vmem:[%s3 + $0x18] sm:$0xff]
    %v204 = vld [vmem:[%s3 + $0x20] sm:$0xff]
    %v205 = vld [vmem:[%s3 + $0x28] sm:$0xff]
    %v206 = vld [vmem:[%s3 + $0x30] sm:$0xff]
    %v207 = vld [vmem:[%s3 + $0x38] sm:$0xff]
    %v208 = vld [vmem:[%s4] sm:$0xff]
    %v209 = vld [vmem:[%s4 + $0x8] sm:$0xff]
    %v210 = vld [vmem:[%s4 + $0x10] sm:$0xff]
    %v211 = vld [vmem:[%s4 + $0x18] sm:$0xff]
    %v212 = vld [vmem:[%s4 + $0x20] sm:$0xff]
    %v213 = vld [vmem:[%s4 + $0x28] sm:$0xff]
    %v214 = vld [vmem:[%s4 + $0x30] sm:$0xff]
    %v215 = vld [vmem:[%s4 + $0x38] sm:$0xff]
    %217 = vset.pattern.permute.xlu0 0
    %218 = vperm.xlu0 %217, %v208
    %v219 = vpop.permute.xlu0 %218
    %222 = vset.pattern.permute.xlu0 0
    %223 = vperm.xlu0 %222, %v209
    %v224 = vpop.permute.xlu0 %223
    %227 = vset.pattern.permute.xlu0 0
    %228 = vperm.xlu0 %227, %v210
    %v229 = vpop.permute.xlu0 %228
    %232 = vset.pattern.permute.xlu0 0
    %233 = vperm.xlu0 %232, %v211
    %v234 = vpop.permute.xlu0 %233
    %237 = vset.pattern.permute.xlu0 0
    %238 = vperm.xlu0 %237, %v212
    %v239 = vpop.permute.xlu0 %238
    %242 = vset.pattern.permute.xlu0 0
    %243 = vperm.xlu0 %242, %v213
    %v244 = vpop.permute.xlu0 %243
    %247 = vset.pattern.permute.xlu0 0
    %248 = vperm.xlu0 %247, %v214
    %v249 = vpop.permute.xlu0 %248
    %252 = vset.pattern.permute.xlu0 0
    %253 = vperm.xlu0 %252, %v215
    %v254 = vpop.permute.xlu0 %253
    %vm256 = vcmask 261120
    %v258 = vsel %vm256, %v200, 0
    %v261 = vsel %vm256, %v201, 0
    %v264 = vsel %vm256, %v202, 0
    %v267 = vsel %vm256, %v203, 0
    %v270 = vsel %vm256, %v204, 0
    %v273 = vsel %vm256, %v205, 0
    %v276 = vsel %vm256, %v206, 0
    %v279 = vsel %vm256, %v207, 0
    %281 = vmatprep.subr.mxu0 0.0
    %282 = vmatpush1.msra.mxu0 %v196
    %283 = vmatprep.subr.mxu0 0.0
    %284 = vmatpush1.msra.mxu0 %v197
    %285 = vmatprep.subr.mxu0 0.0
    %286 = vmatpush1.msra.mxu0 %v198
    %287 = vmatprep.subr.mxu0 0.0
    %288 = vmatpush1.msra.mxu0 %v199
    %289 = vmatprep.subr.mxu0 0.0
    %290 = vmatpush1.msra.mxu0 0.0
    %291 = vmatprep.subr.mxu0 0.0
    %292 = vmatpush1.msra.mxu0 0.0
    %293 = vmatprep.subr.mxu0 0.0
    %294 = vmatpush1.msra.mxu0 0.0
    %295 = vmatprep.subr.mxu0 0.0
    %296 = vmatpush1.msra.mxu0 0.0
    %297 = vmatprep.subr.mxu0 0.0
    %298 = vmatpush1.msra.mxu0 0.0
    %299 = vmatprep.subr.mxu0 0.0
    %300 = vmatpush1.msra.mxu0 0.0
    %301 = vmatprep.subr.mxu0 0.0
    %302 = vmatpush1.msra.mxu0 0.0
    %303 = vmatprep.subr.mxu0 0.0
    %304 = vmatpush1.msra.mxu0 0.0
    %305 = vmatprep.subr.mxu0 0.0
    %306 = vmatpush1.msra.mxu0 0.0
    %307 = vmatprep.subr.mxu0 0.0
    %308 = vmatpush1.msra.mxu0 0.0
    %309 = vmatprep.subr.mxu0 0.0
    %310 = vmatpush1.msra.mxu0 0.0
    %311 = vmatprep.subr.mxu0 0.0
    %312 = vmatpush1.msra.mxu0 0.0
    %313 = vmatprep.subr.mxu0 0.0
    %314 = vmatpush1.msra.mxu0 0.0
    %315 = vmatprep.subr.mxu0 0.0
    %316 = vmatpush1.msra.mxu0 0.0
    %317 = vmatprep.subr.mxu0 0.0
    %318 = vmatpush1.msra.mxu0 0.0
    %319 = vmatprep.subr.mxu0 0.0
    %320 = vmatpush1.msra.mxu0 0.0
    %321 = vmatprep.subr.mxu0 0.0
    %322 = vmatpush1.msra.mxu0 0.0
    %323 = vmatprep.subr.mxu0 0.0
    %324 = vmatpush1.msra.mxu0 0.0
    %325 = vmatprep.subr.mxu0 0.0
    %326 = vmatpush1.msra.mxu0 0.0
    %327 = vmatprep.subr.mxu0 0.0
    %328 = vmatpush1.msra.mxu0 0.0
    %329 = vmatprep.subr.mxu0 0.0
    %330 = vmatpush1.msra.mxu0 0.0
    %331 = vmatprep.subr.mxu0 0.0
    %332 = vmatpush1.msra.mxu0 0.0
    %333 = vmatprep.subr.mxu0 0.0
    %334 = vmatpush1.msra.mxu0 0.0
    %335 = vmatprep.subr.mxu0 0.0
    %336 = vmatpush1.msra.mxu0 0.0
    %337 = vmatprep.subr.mxu0 0.0
    %338 = vmatpush1.msra.mxu0 0.0
    %339 = vmatprep.subr.mxu0 0.0
    %340 = vmatpush1.msra.mxu0 0.0
    %341 = vmatprep.subr.mxu0 0.0
    %342 = vmatpush1.msra.mxu0 0.0
    %343 = vmatprep.subr.mxu0 0.0
    %344 = vmatpush1.msra.mxu0 0.0
    %345 = vmatprep.mubr.f32.mxu0 0.0
    %346 = vmatmul.mubr.f32.gmra.mrb[0].mxu0 %v258
    %v347 = vpop.f32.mrb[0].mxu0
    %v348 = vadd.f32 %v219, %v347
    %v349 = vpop.f32.mrb[0].mxu0
    %350 = vmatprep.mubr.f32.mxu0 0.0
    %351 = vmatmul.mubr.f32.gmra.mrb[0].mxu0 %v261
    %v352 = vpop.f32.mrb[0].mxu0
    %v353 = vadd.f32 %v224, %v352
    %v354 = vpop.f32.mrb[0].mxu0
    %355 = vmatprep.mubr.f32.mxu0 0.0
    %356 = vmatmul.mubr.f32.gmra.mrb[0].mxu0 %v264
    %v357 = vpop.f32.mrb[0].mxu0
    %v358 = vadd.f32 %v229, %v357
    %v359 = vpop.f32.mrb[0].mxu0
    %360 = vmatprep.mubr.f32.mxu0 0.0
    %361 = vmatmul.mubr.f32.gmra.mrb[0].mxu0 %v267
    %v362 = vpop.f32.mrb[0].mxu0
    %v363 = vadd.f32 %v234, %v362
    %v364 = vpop.f32.mrb[0].mxu0
    %365 = vmatprep.mubr.f32.mxu0 0.0
    %366 = vmatmul.mubr.f32.gmra.mrb[0].mxu0 %v270
    %v367 = vpop.f32.mrb[0].mxu0
    %v368 = vadd.f32 %v239, %v367
    %v369 = vpop.f32.mrb[0].mxu0
    %370 = vmatprep.mubr.f32.mxu0 0.0
    %371 = vmatmul.mubr.f32.gmra.mrb[0].mxu0 %v273
    %v372 = vpop.f32.mrb[0].mxu0
    %v373 = vadd.f32 %v244, %v372
    %v374 = vpop.f32.mrb[0].mxu0
    %375 = vmatprep.mubr.f32.mxu0 0.0
    %376 = vmatmul.mubr.f32.gmra.mrb[0].mxu0 %v276
    %v377 = vpop.f32.mrb[0].mxu0
    %v378 = vadd.f32 %v249, %v377
    %v379 = vpop.f32.mrb[0].mxu0
    %380 = vmatprep.mubr.f32.mxu0 0.0
    %381 = vmatmul.mubr.f32.gmra.mrb[0].mxu0 %v279
    %v382 = vpop.f32.mrb[0].mxu0
    %v383 = vadd.f32 %v254, %v382
    %v384 = vpop.f32.mrb[0].mxu0
    %385 = vdwg.mxu0
    %v386 = vsel %vm63, 1, 0
    %vm387 = vcmp.eq.s32.totalorder %v386, 1
    %v388 = vsel %vm387, %v348, 0.0
    %v389 = vsel %vm387, %v353, 0.0
    %v390 = vsel %vm387, %v358, 0.0
    %v391 = vsel %vm387, %v363, 0.0
    %v392 = vsel %vm387, %v368, 0.0
    %v393 = vsel %vm387, %v373, 0.0
    %v394 = vsel %vm387, %v378, 0.0
    %v395 = vsel %vm387, %v383, 0.0
    %vm396 = vcmp.gt.f32.partialorder %v388, 0.0
    %vm397 = vcmp.gt.f32.partialorder %v389, 0.0
    %vm398 = vcmp.gt.f32.partialorder %v390, 0.0
    %vm399 = vcmp.gt.f32.partialorder %v391, 0.0
    %vm400 = vcmp.gt.f32.partialorder %v392, 0.0
    %vm401 = vcmp.gt.f32.partialorder %v393, 0.0
    %vm402 = vcmp.gt.f32.partialorder %v394, 0.0
    %vm403 = vcmp.gt.f32.partialorder %v395, 0.0
    %v404 = vmul.f32 %v388, 1.442695
    %v405 = vpow.pop %v404
    %v406 = vmul.f32 %v389, 1.442695
    %v407 = vpow.pop %v406
    %v408 = vmul.f32 %v390, 1.442695
    %v409 = vpow.pop %v408
    %v410 = vmul.f32 %v391, 1.442695
    %v411 = vpow.pop %v410
    %v412 = vmul.f32 %v392, 1.442695
    %v413 = vpow.pop %v412
    %v414 = vmul.f32 %v393, 1.442695
    %v415 = vpow.pop %v414
    %v416 = vmul.f32 %v394, 1.442695
    %v417 = vpow.pop %v416
    %v418 = vmul.f32 %v395, 1.442695
    %v419 = vpow.pop %v418
    %v420 = vsub.f32 %v405, 1.0
    %v421 = vsub.f32 %v407, 1.0
    %v422 = vsub.f32 %v409, 1.0
    %v423 = vsub.f32 %v411, 1.0
    %v424 = vsub.f32 %v413, 1.0
    %v425 = vsub.f32 %v415, 1.0
    %v426 = vsub.f32 %v417, 1.0
    %v427 = vsub.f32 %v419, 1.0
    %v428 = vsel %vm396, %v388, %v420
    %v429 = vsel %vm397, %v389, %v421
    %v430 = vsel %vm398, %v390, %v422
    %v431 = vsel %vm399, %v391, %v423
    %v432 = vsel %vm400, %v392, %v424
    %v433 = vsel %vm401, %v393, %v425
    %v434 = vsel %vm402, %v394, %v426
    %v435 = vsel %vm403, %v395, %v427
    %436 = vadd.xlane.f32.xlu0 %v428
    %v437 = vpop.xlane.xlu0 %436
    %438 = vadd.xlane.f32.xlu0 %v429
    %v439 = vpop.xlane.xlu0 %438
    %440 = vadd.xlane.f32.xlu0 %v430
    %v441 = vpop.xlane.xlu0 %440
    %442 = vadd.xlane.f32.xlu0 %v431
    %v443 = vpop.xlane.xlu0 %442
    %444 = vadd.xlane.f32.xlu0 %v432
    %v445 = vpop.xlane.xlu0 %444
    %446 = vadd.xlane.f32.xlu0 %v433
    %v447 = vpop.xlane.xlu0 %446
    %448 = vadd.xlane.f32.xlu0 %v434
    %v449 = vpop.xlane.xlu0 %448
    %450 = vadd.xlane.f32.xlu0 %v435
    %v451 = vpop.xlane.xlu0 %450
    %v452 = vmul.f32 %v437, 0.03125
    %v453 = vmul.f32 %v439, 0.03125
    %v454 = vmul.f32 %v441, 0.03125
    %v455 = vmul.f32 %v443, 0.03125
    %v456 = vmul.f32 %v445, 0.03125
    %v457 = vmul.f32 %v447, 0.03125
    %v458 = vmul.f32 %v449, 0.03125
    %v459 = vmul.f32 %v451, 0.03125
    %v460 = vmul.f32 %v428, %v428
    %v461 = vmul.f32 %v429, %v429
    %v462 = vmul.f32 %v430, %v430
    %v463 = vmul.f32 %v431, %v431
    %v464 = vmul.f32 %v432, %v432
    %v465 = vmul.f32 %v433, %v433
    %v466 = vmul.f32 %v434, %v434
    %v467 = vmul.f32 %v435, %v435
    %468 = vadd.xlane.f32.xlu0 %v460
    %v469 = vpop.xlane.xlu0 %468
    %470 = vadd.xlane.f32.xlu0 %v461
    %v471 = vpop.xlane.xlu0 %470
    %472 = vadd.xlane.f32.xlu0 %v462
    %v473 = vpop.xlane.xlu0 %472
    %474 = vadd.xlane.f32.xlu0 %v463
    %v475 = vpop.xlane.xlu0 %474
    %476 = vadd.xlane.f32.xlu0 %v464
    %v477 = vpop.xlane.xlu0 %476
    %478 = vadd.xlane.f32.xlu0 %v465
    %v479 = vpop.xlane.xlu0 %478
    %480 = vadd.xlane.f32.xlu0 %v466
    %v481 = vpop.xlane.xlu0 %480
    %482 = vadd.xlane.f32.xlu0 %v467
    %v483 = vpop.xlane.xlu0 %482
    %v484 = vmul.f32 %v469, 0.03125
    %v485 = vmul.f32 %v471, 0.03125
    %v486 = vmul.f32 %v473, 0.03125
    %v487 = vmul.f32 %v475, 0.03125
    %v488 = vmul.f32 %v477, 0.03125
    %v489 = vmul.f32 %v479, 0.03125
    %v490 = vmul.f32 %v481, 0.03125
    %v491 = vmul.f32 %v483, 0.03125
    %v492 = vmul.f32 %v452, %v452
    %v493 = vmul.f32 %v453, %v453
    %v494 = vmul.f32 %v454, %v454
    %v495 = vmul.f32 %v455, %v455
    %v496 = vmul.f32 %v456, %v456
    %v497 = vmul.f32 %v457, %v457
    %v498 = vmul.f32 %v458, %v458
    %v499 = vmul.f32 %v459, %v459
    %v500 = vsub.f32 %v484, %v492
    %v501 = vsub.f32 %v485, %v493
    %v502 = vsub.f32 %v486, %v494
    %v503 = vsub.f32 %v487, %v495
    %v504 = vsub.f32 %v488, %v496
    %v505 = vsub.f32 %v489, %v497
    %v506 = vsub.f32 %v490, %v498
    %v507 = vsub.f32 %v491, %v499
    %v508 = vmax.f32 %v500, 0.0
    %v509 = vmax.f32 %v501, 0.0
    %v510 = vmax.f32 %v502, 0.0
    %v511 = vmax.f32 %v503, 0.0
    %v512 = vmax.f32 %v504, 0.0
    %v513 = vmax.f32 %v505, 0.0
    %v514 = vmax.f32 %v506, 0.0
    %v515 = vmax.f32 %v507, 0.0
    %v516 = vld [vmem:[%s5] sm:$0xff]
    %v517 = vld [vmem:[%s5 + $0x8] sm:$0xff]
    %v518 = vld [vmem:[%s5 + $0x10] sm:$0xff]
    %v519 = vld [vmem:[%s5 + $0x18] sm:$0xff]
    %v520 = vld [vmem:[%s5 + $0x20] sm:$0xff]
    %v521 = vld [vmem:[%s5 + $0x28] sm:$0xff]
    %v522 = vld [vmem:[%s5 + $0x30] sm:$0xff]
    %v523 = vld [vmem:[%s5 + $0x38] sm:$0xff]
    %v524 = vadd.f32 %v508, 1e-05
    %v525 = vadd.f32 %v509, 1e-05
    %v526 = vadd.f32 %v510, 1e-05
    %v527 = vadd.f32 %v511, 1e-05
    %v528 = vadd.f32 %v512, 1e-05
    %v529 = vadd.f32 %v513, 1e-05
    %v530 = vadd.f32 %v514, 1e-05
    %v531 = vadd.f32 %v515, 1e-05
    %v532 = vrsqrt.pop %v524
    %v533 = vrsqrt.pop %v525
    %v534 = vrsqrt.pop %v526
    %v535 = vrsqrt.pop %v527
    %v536 = vrsqrt.pop %v528
    %v537 = vrsqrt.pop %v529
    %v538 = vrsqrt.pop %v530
    %v539 = vrsqrt.pop %v531
    %v540 = vmul.f32 %v516, %v532
    %v541 = vmul.f32 %v517, %v533
    %v542 = vmul.f32 %v518, %v534
    %v543 = vmul.f32 %v519, %v535
    %v544 = vmul.f32 %v520, %v536
    %v545 = vmul.f32 %v521, %v537
    %v546 = vmul.f32 %v522, %v538
    %v547 = vmul.f32 %v523, %v539
    %v548 = vld [vmem:[%s6] sm:$0xff]
    %v549 = vld [vmem:[%s6 + $0x8] sm:$0xff]
    %v550 = vld [vmem:[%s6 + $0x10] sm:$0xff]
    %v551 = vld [vmem:[%s6 + $0x18] sm:$0xff]
    %v552 = vld [vmem:[%s6 + $0x20] sm:$0xff]
    %v553 = vld [vmem:[%s6 + $0x28] sm:$0xff]
    %v554 = vld [vmem:[%s6 + $0x30] sm:$0xff]
    %v555 = vld [vmem:[%s6 + $0x38] sm:$0xff]
    %v556 = vmul.f32 %v452, %v540
    %v557 = vmul.f32 %v453, %v541
    %v558 = vmul.f32 %v454, %v542
    %v559 = vmul.f32 %v455, %v543
    %v560 = vmul.f32 %v456, %v544
    %v561 = vmul.f32 %v457, %v545
    %v562 = vmul.f32 %v458, %v546
    %v563 = vmul.f32 %v459, %v547
    %v564 = vsub.f32 %v548, %v556
    %v565 = vsub.f32 %v549, %v557
    %v566 = vsub.f32 %v550, %v558
    %v567 = vsub.f32 %v551, %v559
    %v568 = vsub.f32 %v552, %v560
    %v569 = vsub.f32 %v553, %v561
    %v570 = vsub.f32 %v554, %v562
    %v571 = vsub.f32 %v555, %v563
    %573 = vset.pattern.permute.xlu0 0
    %574 = vperm.xlu0 %573, %v540
    %v575 = vpop.permute.xlu0 %574
    %578 = vset.pattern.permute.xlu0 0
    %579 = vperm.xlu0 %578, %v541
    %v580 = vpop.permute.xlu0 %579
    %583 = vset.pattern.permute.xlu0 0
    %584 = vperm.xlu0 %583, %v542
    %v585 = vpop.permute.xlu0 %584
    %588 = vset.pattern.permute.xlu0 0
    %589 = vperm.xlu0 %588, %v543
    %v590 = vpop.permute.xlu0 %589
    %593 = vset.pattern.permute.xlu0 0
    %594 = vperm.xlu0 %593, %v544
    %v595 = vpop.permute.xlu0 %594
    %598 = vset.pattern.permute.xlu0 0
    %599 = vperm.xlu0 %598, %v545
    %v600 = vpop.permute.xlu0 %599
    %603 = vset.pattern.permute.xlu0 0
    %604 = vperm.xlu0 %603, %v546
    %v605 = vpop.permute.xlu0 %604
    %608 = vset.pattern.permute.xlu0 0
    %609 = vperm.xlu0 %608, %v547
    %v610 = vpop.permute.xlu0 %609
    %v612 = vmul.f32 %v428, %v575
    %v613 = vmul.f32 %v429, %v580
    %v614 = vmul.f32 %v430, %v585
    %v615 = vmul.f32 %v431, %v590
    %v616 = vmul.f32 %v432, %v595
    %v617 = vmul.f32 %v433, %v600
    %v618 = vmul.f32 %v434, %v605
    %v619 = vmul.f32 %v435, %v610
    %621 = vset.pattern.permute.xlu0 0
    %622 = vperm.xlu0 %621, %v564
    %v623 = vpop.permute.xlu0 %622
    %626 = vset.pattern.permute.xlu0 0
    %627 = vperm.xlu0 %626, %v565
    %v628 = vpop.permute.xlu0 %627
    %631 = vset.pattern.permute.xlu0 0
    %632 = vperm.xlu0 %631, %v566
    %v633 = vpop.permute.xlu0 %632
    %636 = vset.pattern.permute.xlu0 0
    %637 = vperm.xlu0 %636, %v567
    %v638 = vpop.permute.xlu0 %637
    %641 = vset.pattern.permute.xlu0 0
    %642 = vperm.xlu0 %641, %v568
    %v643 = vpop.permute.xlu0 %642
    %646 = vset.pattern.permute.xlu0 0
    %647 = vperm.xlu0 %646, %v569
    %v648 = vpop.permute.xlu0 %647
    %651 = vset.pattern.permute.xlu0 0
    %652 = vperm.xlu0 %651, %v570
    %v653 = vpop.permute.xlu0 %652
    %656 = vset.pattern.permute.xlu0 0
    %657 = vperm.xlu0 %656, %v571
    %v658 = vpop.permute.xlu0 %657
    %v660 = vadd.f32 %v612, %v623
    %v661 = vadd.f32 %v613, %v628
    %v662 = vadd.f32 %v614, %v633
    %v663 = vadd.f32 %v615, %v638
    %v664 = vadd.f32 %v616, %v643
    %v665 = vadd.f32 %v617, %v648
    %v666 = vadd.f32 %v618, %v653
    %v667 = vadd.f32 %v619, %v658
    %v668 = vld [vmem:[%s7] sm:$0xff]
    %v669 = vld [vmem:[%s7 + $0x8] sm:$0xff]
    %v670 = vld [vmem:[%s7 + $0x10] sm:$0xff]
    %v671 = vld [vmem:[%s7 + $0x18] sm:$0xff]
    %v672 = vld [vmem:[%s8] sm:$0xff]
    %v673 = vld [vmem:[%s8 + $0x8] sm:$0xff]
    %v674 = vld [vmem:[%s8 + $0x10] sm:$0xff]
    %v675 = vld [vmem:[%s8 + $0x18] sm:$0xff]
    %677 = vset.pattern.permute.xlu0 0
    %678 = vperm.xlu0 %677, %v672
    %v679 = vpop.permute.xlu0 %678
    %682 = vset.pattern.permute.xlu0 0
    %683 = vperm.xlu0 %682, %v673
    %v684 = vpop.permute.xlu0 %683
    %687 = vset.pattern.permute.xlu0 0
    %688 = vperm.xlu0 %687, %v674
    %v689 = vpop.permute.xlu0 %688
    %692 = vset.pattern.permute.xlu0 0
    %693 = vperm.xlu0 %692, %v675
    %v694 = vpop.permute.xlu0 %693
    %vm696 = vcmask 523264
    %v698 = vsel %vm696, %v668, 0
    %v701 = vsel %vm696, %v669, 0
    %v704 = vsel %vm696, %v670, 0
    %v707 = vsel %vm696, %v671, 0
    %709 = vmatprep.subr.mxu0 0.0
    %710 = vmatpush1.msra.mxu0 %v660
    %711 = vmatprep.subr.mxu0 0.0
    %712 = vmatpush1.msra.mxu0 %v661
    %713 = vmatprep.subr.mxu0 0.0
    %714 = vmatpush1.msra.mxu0 %v662
    %715 = vmatprep.subr.mxu0 0.0
    %716 = vmatpush1.msra.mxu0 %v663
    %717 = vmatprep.subr.mxu0 0.0
    %718 = vmatpush1.msra.mxu0 %v664
    %719 = vmatprep.subr.mxu0 0.0
    %720 = vmatpush1.msra.mxu0 %v665
    %721 = vmatprep.subr.mxu0 0.0
    %722 = vmatpush1.msra.mxu0 %v666
    %723 = vmatprep.subr.mxu0 0.0
    %724 = vmatpush1.msra.mxu0 %v667
    %725 = vmatprep.subr.mxu0 0.0
    %726 = vmatpush1.msra.mxu0 0.0
    %727 = vmatprep.subr.mxu0 0.0
    %728 = vmatpush1.msra.mxu0 0.0
    %729 = vmatprep.subr.mxu0 0.0
    %730 = vmatpush1.msra.mxu0 0.0
    %731 = vmatprep.subr.mxu0 0.0
    %732 = vmatpush1.msra.mxu0 0.0
    %733 = vmatprep.subr.mxu0 0.0
    %734 = vmatpush1.msra.mxu0 0.0
    %735 = vmatprep.subr.mxu0 0.0
    %736 = vmatpush1.msra.mxu0 0.0
    %737 = vmatprep.subr.mxu0 0.0
    %738 = vmatpush1.msra.mxu0 0.0
    %739 = vmatprep.subr.mxu0 0.0
    %740 = vmatpush1.msra.mxu0 0.0
    %741 = vmatprep.subr.mxu0 0.0
    %742 = vmatpush1.msra.mxu0 0.0
    %743 = vmatprep.subr.mxu0 0.0
    %744 = vmatpush1.msra.mxu0 0.0
    %745 = vmatprep.subr.mxu0 0.0
    %746 = vmatpush1.msra.mxu0 0.0
    %747 = vmatprep.subr.mxu0 0.0
    %748 = vmatpush1.msra.mxu0 0.0
    %749 = vmatprep.subr.mxu0 0.0
    %750 = vmatpush1.msra.mxu0 0.0
    %751 = vmatprep.subr.mxu0 0.0
    %752 = vmatpush1.msra.mxu0 0.0
    %753 = vmatprep.subr.mxu0 0.0
    %754 = vmatpush1.msra.mxu0 0.0
    %755 = vmatprep.subr.mxu0 0.0
    %756 = vmatpush1.msra.mxu0 0.0
    %757 = vmatprep.subr.mxu0 0.0
    %758 = vmatpush1.msra.mxu0 0.0
    %759 = vmatprep.subr.mxu0 0.0
    %760 = vmatpush1.msra.mxu0 0.0
    %761 = vmatprep.subr.mxu0 0.0
    %762 = vmatpush1.msra.mxu0 0.0
    %763 = vmatprep.subr.mxu0 0.0
    %764 = vmatpush1.msra.mxu0 0.0
    %765 = vmatprep.subr.mxu0 0.0
    %766 = vmatpush1.msra.mxu0 0.0
    %767 = vmatprep.subr.mxu0 0.0
    %768 = vmatpush1.msra.mxu0 0.0
    %769 = vmatprep.subr.mxu0 0.0
    %770 = vmatpush1.msra.mxu0 0.0
    %771 = vmatprep.subr.mxu0 0.0
    %772 = vmatpush1.msra.mxu0 0.0
    %773 = vmatprep.mubr.f32.mxu0 0.0
    %774 = vmatmul.mubr.f32.gmra.mrb[0].mxu0 %v698
    %v775 = vpop.f32.mrb[0].mxu0
    %v776 = vadd.f32 %v679, %v775
    %v777 = vpop.f32.mrb[0].mxu0
    %778 = vmatprep.mubr.f32.mxu0 0.0
    %779 = vmatmul.mubr.f32.gmra.mrb[0].mxu0 %v701
    %v780 = vpop.f32.mrb[0].mxu0
    %v781 = vadd.f32 %v684, %v780
    %v782 = vpop.f32.mrb[0].mxu0
    %783 = vmatprep.mubr.f32.mxu0 0.0
    %784 = vmatmul.mubr.f32.gmra.mrb[0].mxu0 %v704
    %v785 = vpop.f32.mrb[0].mxu0
    %v786 = vadd.f32 %v689, %v785
    %v787 = vpop.f32.mrb[0].mxu0
    %788 = vmatprep.mubr.f32.mxu0 0.0
    %789 = vmatmul.mubr.f32.gmra.mrb[0].mxu0 %v707
    %v790 = vpop.f32.mrb[0].mxu0
    %v791 = vadd.f32 %v694, %v790
    %v792 = vpop.f32.mrb[0].mxu0
    %793 = vdwg.mxu0
    %v794 = vsel %vm387, %v776, 0.0
    %v795 = vsel %vm387, %v781, 0.0
    %v796 = vsel %vm387, %v786, 0.0
    %v797 = vsel %vm387, %v791, 0.0
    %vm798 = vcmp.gt.f32.partialorder %v794, 0.0
    %vm799 = vcmp.gt.f32.partialorder %v795, 0.0
    %vm800 = vcmp.gt.f32.partialorder %v796, 0.0
    %vm801 = vcmp.gt.f32.partialorder %v797, 0.0
    %v802 = vmul.f32 %v794, 1.442695
    %v803 = vpow.pop %v802
    %v804 = vmul.f32 %v795, 1.442695
    %v805 = vpow.pop %v804
    %v806 = vmul.f32 %v796, 1.442695
    %v807 = vpow.pop %v806
    %v808 = vmul.f32 %v797, 1.442695
    %v809 = vpow.pop %v808
    %v810 = vsub.f32 %v803, 1.0
    %v811 = vsub.f32 %v805, 1.0
    %v812 = vsub.f32 %v807, 1.0
    %v813 = vsub.f32 %v809, 1.0
    %v814 = vsel %vm798, %v794, %v810
    %v815 = vsel %vm799, %v795, %v811
    %v816 = vsel %vm800, %v796, %v812
    %v817 = vsel %vm801, %v797, %v813
    %818 = vadd.xlane.f32.xlu0 %v814
    %v819 = vpop.xlane.xlu0 %818
    %820 = vadd.xlane.f32.xlu0 %v815
    %v821 = vpop.xlane.xlu0 %820
    %822 = vadd.xlane.f32.xlu0 %v816
    %v823 = vpop.xlane.xlu0 %822
    %824 = vadd.xlane.f32.xlu0 %v817
    %v825 = vpop.xlane.xlu0 %824
    %v826 = vmul.f32 %v819, 0.03125
    %v827 = vmul.f32 %v821, 0.03125
    %v828 = vmul.f32 %v823, 0.03125
    %v829 = vmul.f32 %v825, 0.03125
    %v830 = vmul.f32 %v814, %v814
    %v831 = vmul.f32 %v815, %v815
    %v832 = vmul.f32 %v816, %v816
    %v833 = vmul.f32 %v817, %v817
    %834 = vadd.xlane.f32.xlu0 %v830
    %v835 = vpop.xlane.xlu0 %834
    %836 = vadd.xlane.f32.xlu0 %v831
    %v837 = vpop.xlane.xlu0 %836
    %838 = vadd.xlane.f32.xlu0 %v832
    %v839 = vpop.xlane.xlu0 %838
    %840 = vadd.xlane.f32.xlu0 %v833
    %v841 = vpop.xlane.xlu0 %840
    %v842 = vmul.f32 %v835, 0.03125
    %v843 = vmul.f32 %v837, 0.03125
    %v844 = vmul.f32 %v839, 0.03125
    %v845 = vmul.f32 %v841, 0.03125
    %v846 = vmul.f32 %v826, %v826
    %v847 = vmul.f32 %v827, %v827
    %v848 = vmul.f32 %v828, %v828
    %v849 = vmul.f32 %v829, %v829
    %v850 = vsub.f32 %v842, %v846
    %v851 = vsub.f32 %v843, %v847
    %v852 = vsub.f32 %v844, %v848
    %v853 = vsub.f32 %v845, %v849
    %v854 = vmax.f32 %v850, 0.0
    %v855 = vmax.f32 %v851, 0.0
    %v856 = vmax.f32 %v852, 0.0
    %v857 = vmax.f32 %v853, 0.0
    %v858 = vld [vmem:[%s9] sm:$0xff]
    %v859 = vld [vmem:[%s9 + $0x8] sm:$0xff]
    %v860 = vld [vmem:[%s9 + $0x10] sm:$0xff]
    %v861 = vld [vmem:[%s9 + $0x18] sm:$0xff]
    %v862 = vadd.f32 %v854, 1e-05
    %v863 = vadd.f32 %v855, 1e-05
    %v864 = vadd.f32 %v856, 1e-05
    %v865 = vadd.f32 %v857, 1e-05
    %v866 = vrsqrt.pop %v862
    %v867 = vrsqrt.pop %v863
    %v868 = vrsqrt.pop %v864
    %v869 = vrsqrt.pop %v865
    %v870 = vmul.f32 %v858, %v866
    %v871 = vmul.f32 %v859, %v867
    %v872 = vmul.f32 %v860, %v868
    %v873 = vmul.f32 %v861, %v869
    %v874 = vld [vmem:[%s10] sm:$0xff]
    %v875 = vld [vmem:[%s10 + $0x8] sm:$0xff]
    %v876 = vld [vmem:[%s10 + $0x10] sm:$0xff]
    %v877 = vld [vmem:[%s10 + $0x18] sm:$0xff]
    %v878 = vmul.f32 %v826, %v870
    %v879 = vmul.f32 %v827, %v871
    %v880 = vmul.f32 %v828, %v872
    %v881 = vmul.f32 %v829, %v873
    %v882 = vsub.f32 %v874, %v878
    %v883 = vsub.f32 %v875, %v879
    %v884 = vsub.f32 %v876, %v880
    %v885 = vsub.f32 %v877, %v881
    %887 = vset.pattern.permute.xlu0 0
    %888 = vperm.xlu0 %887, %v870
    %v889 = vpop.permute.xlu0 %888
    %892 = vset.pattern.permute.xlu0 0
    %893 = vperm.xlu0 %892, %v871
    %v894 = vpop.permute.xlu0 %893
    %897 = vset.pattern.permute.xlu0 0
    %898 = vperm.xlu0 %897, %v872
    %v899 = vpop.permute.xlu0 %898
    %902 = vset.pattern.permute.xlu0 0
    %903 = vperm.xlu0 %902, %v873
    %v904 = vpop.permute.xlu0 %903
    %v906 = vmul.f32 %v814, %v889
    %v907 = vmul.f32 %v815, %v894
    %v908 = vmul.f32 %v816, %v899
    %v909 = vmul.f32 %v817, %v904
    %911 = vset.pattern.permute.xlu0 0
    %912 = vperm.xlu0 %911, %v882
    %v913 = vpop.permute.xlu0 %912
    %916 = vset.pattern.permute.xlu0 0
    %917 = vperm.xlu0 %916, %v883
    %v918 = vpop.permute.xlu0 %917
    %921 = vset.pattern.permute.xlu0 0
    %922 = vperm.xlu0 %921, %v884
    %v923 = vpop.permute.xlu0 %922
    %926 = vset.pattern.permute.xlu0 0
    %927 = vperm.xlu0 %926, %v885
    %v928 = vpop.permute.xlu0 %927
    %v930 = vadd.f32 %v906, %v913
    %v931 = vadd.f32 %v907, %v918
    %v932 = vadd.f32 %v908, %v923
    %v933 = vadd.f32 %v909, %v928
    %v934 = vld [vmem:[%s11] sm:$0xff]
    %v935 = vld [vmem:[%s11 + $0x8] sm:$0xff]
    %v936 = vld [vmem:[%s12] sm:$0xff]
    %v937 = vld [vmem:[%s12 + $0x8] sm:$0xff]
    %939 = vset.pattern.permute.xlu0 0
    %940 = vperm.xlu0 %939, %v936
    %v941 = vpop.permute.xlu0 %940
    %944 = vset.pattern.permute.xlu0 0
    %945 = vperm.xlu0 %944, %v937
    %v946 = vpop.permute.xlu0 %945
    %v949 = vsel %vm256, %v934, 0
    %v952 = vsel %vm256, %v935, 0
    %954 = vmatprep.subr.mxu0 0.0
    %955 = vmatpush1.msra.mxu0 %v930
    %956 = vmatprep.subr.mxu0 0.0
    %957 = vmatpush1.msra.mxu0 %v931
    %958 = vmatprep.subr.mxu0 0.0
    %959 = vmatpush1.msra.mxu0 %v932
    %960 = vmatprep.subr.mxu0 0.0
    %961 = vmatpush1.msra.mxu0 %v933
    %962 = vmatprep.subr.mxu0 0.0
    %963 = vmatpush1.msra.mxu0 0.0
    %964 = vmatprep.subr.mxu0 0.0
    %965 = vmatpush1.msra.mxu0 0.0
    %966 = vmatprep.subr.mxu0 0.0
    %967 = vmatpush1.msra.mxu0 0.0
    %968 = vmatprep.subr.mxu0 0.0
    %969 = vmatpush1.msra.mxu0 0.0
    %970 = vmatprep.subr.mxu0 0.0
    %971 = vmatpush1.msra.mxu0 0.0
    %972 = vmatprep.subr.mxu0 0.0
    %973 = vmatpush1.msra.mxu0 0.0
    %974 = vmatprep.subr.mxu0 0.0
    %975 = vmatpush1.msra.mxu0 0.0
    %976 = vmatprep.subr.mxu0 0.0
    %977 = vmatpush1.msra.mxu0 0.0
    %978 = vmatprep.subr.mxu0 0.0
    %979 = vmatpush1.msra.mxu0 0.0
    %980 = vmatprep.subr.mxu0 0.0
    %981 = vmatpush1.msra.mxu0 0.0
    %982 = vmatprep.subr.mxu0 0.0
    %983 = vmatpush1.msra.mxu0 0.0
    %984 = vmatprep.subr.mxu0 0.0
    %985 = vmatpush1.msra.mxu0 0.0
    %986 = vmatprep.subr.mxu0 0.0
    %987 = vmatpush1.msra.mxu0 0.0
    %988 = vmatprep.subr.mxu0 0.0
    %989 = vmatpush1.msra.mxu0 0.0
    %990 = vmatprep.subr.mxu0 0.0
    %991 = vmatpush1.msra.mxu0 0.0
    %992 = vmatprep.subr.mxu0 0.0
    %993 = vmatpush1.msra.mxu0 0.0
    %994 = vmatprep.subr.mxu0 0.0
    %995 = vmatpush1.msra.mxu0 0.0
    %996 = vmatprep.subr.mxu0 0.0
    %997 = vmatpush1.msra.mxu0 0.0
    %998 = vmatprep.subr.mxu0 0.0
    %999 = vmatpush1.msra.mxu0 0.0
    %1000 = vmatprep.subr.mxu0 0.0
    %1001 = vmatpush1.msra.mxu0 0.0
    %1002 = vmatprep.subr.mxu0 0.0
    %1003 = vmatpush1.msra.mxu0 0.0
    %1004 = vmatprep.subr.mxu0 0.0
    %1005 = vmatpush1.msra.mxu0 0.0
    %1006 = vmatprep.subr.mxu0 0.0
    %1007 = vmatpush1.msra.mxu0 0.0
    %1008 = vmatprep.subr.mxu0 0.0
    %1009 = vmatpush1.msra.mxu0 0.0
    %1010 = vmatprep.subr.mxu0 0.0
    %1011 = vmatpush1.msra.mxu0 0.0
    %1012 = vmatprep.subr.mxu0 0.0
    %1013 = vmatpush1.msra.mxu0 0.0
    %1014 = vmatprep.subr.mxu0 0.0
    %1015 = vmatpush1.msra.mxu0 0.0
    %1016 = vmatprep.subr.mxu0 0.0
    %1017 = vmatpush1.msra.mxu0 0.0
    %1018 = vmatprep.mubr.f32.mxu0 0.0
    %1019 = vmatmul.mubr.f32.gmra.mrb[0].mxu0 %v949
    %v1020 = vpop.f32.mrb[0].mxu0
    %v1021 = vadd.f32 %v941, %v1020
    %v1022 = vpop.f32.mrb[0].mxu0
    %1023 = vmatprep.mubr.f32.mxu0 0.0
    %1024 = vmatmul.mubr.f32.gmra.mrb[0].mxu0 %v952
    %v1025 = vpop.f32.mrb[0].mxu0
    %v1026 = vadd.f32 %v946, %v1025
    %v1027 = vpop.f32.mrb[0].mxu0
    %1028 = vdwg.mxu0
    %v1029 = vsel %vm387, %v1021, 0.0
    %v1030 = vsel %vm387, %v1026, 0.0
    %vm1031 = vcmp.gt.f32.partialorder %v1029, 0.0
    %vm1032 = vcmp.gt.f32.partialorder %v1030, 0.0
    %v1033 = vmul.f32 %v1029, 1.442695
    %v1034 = vpow.pop %v1033
    %v1035 = vmul.f32 %v1030, 1.442695
    %v1036 = vpow.pop %v1035
    %v1037 = vsub.f32 %v1034, 1.0
    %v1038 = vsub.f32 %v1036, 1.0
    %v1039 = vsel %vm1031, %v1029, %v1037
    %v1040 = vsel %vm1032, %v1030, %v1038
    %1041 = vadd.xlane.f32.xlu0 %v1039
    %v1042 = vpop.xlane.xlu0 %1041
    %1043 = vadd.xlane.f32.xlu0 %v1040
    %v1044 = vpop.xlane.xlu0 %1043
    %v1045 = vmul.f32 %v1042, 0.03125
    %v1046 = vmul.f32 %v1044, 0.03125
    %v1047 = vmul.f32 %v1039, %v1039
    %v1048 = vmul.f32 %v1040, %v1040
    %1049 = vadd.xlane.f32.xlu0 %v1047
    %v1050 = vpop.xlane.xlu0 %1049
    %1051 = vadd.xlane.f32.xlu0 %v1048
    %v1052 = vpop.xlane.xlu0 %1051
    %v1053 = vmul.f32 %v1050, 0.03125
    %v1054 = vmul.f32 %v1052, 0.03125
    %v1055 = vmul.f32 %v1045, %v1045
    %v1056 = vmul.f32 %v1046, %v1046
    %v1057 = vsub.f32 %v1053, %v1055
    %v1058 = vsub.f32 %v1054, %v1056
    %v1059 = vmax.f32 %v1057, 0.0
    %v1060 = vmax.f32 %v1058, 0.0
    %v1061 = vld [vmem:[%s13] sm:$0xff]
    %v1062 = vld [vmem:[%s13 + $0x8] sm:$0xff]
    %v1063 = vadd.f32 %v1059, 1e-05
    %v1064 = vadd.f32 %v1060, 1e-05
    %v1065 = vrsqrt.pop %v1063
    %v1066 = vrsqrt.pop %v1064
    %v1067 = vmul.f32 %v1061, %v1065
    %v1068 = vmul.f32 %v1062, %v1066
    %v1069 = vld [vmem:[%s14] sm:$0xff]
    %v1070 = vld [vmem:[%s14 + $0x8] sm:$0xff]
    %v1071 = vmul.f32 %v1045, %v1067
    %v1072 = vmul.f32 %v1046, %v1068
    %v1073 = vsub.f32 %v1069, %v1071
    %v1074 = vsub.f32 %v1070, %v1072
    %1076 = vset.pattern.permute.xlu0 0
    %1077 = vperm.xlu0 %1076, %v1067
    %v1078 = vpop.permute.xlu0 %1077
    %1081 = vset.pattern.permute.xlu0 0
    %1082 = vperm.xlu0 %1081, %v1068
    %v1083 = vpop.permute.xlu0 %1082
    %v1085 = vmul.f32 %v1039, %v1078
    %v1086 = vmul.f32 %v1040, %v1083
    %1088 = vset.pattern.permute.xlu0 0
    %1089 = vperm.xlu0 %1088, %v1073
    %v1090 = vpop.permute.xlu0 %1089
    %1093 = vset.pattern.permute.xlu0 0
    %1094 = vperm.xlu0 %1093, %v1074
    %v1095 = vpop.permute.xlu0 %1094
    %v1097 = vadd.f32 %v1085, %v1090
    %v1098 = vadd.f32 %v1086, %v1095
    %v1099 = vld [vmem:[%s15] sm:$0xff]
    %v1100 = vld [vmem:[%s16] sm:$0xff]
    %1102 = vset.pattern.permute.xlu0 0
    %1103 = vperm.xlu0 %1102, %v1100
    %v1104 = vpop.permute.xlu0 %1103
    %vm1106 = vcmask 130048
    %v1108 = vsel %vm1106, %v1099, 0
    %1110 = vmatprep.subr.mxu0 0.0
    %1111 = vmatpush1.msra.mxu0 %v1097
    %1112 = vmatprep.subr.mxu0 0.0
    %1113 = vmatpush1.msra.mxu0 %v1098
    %1114 = vmatprep.subr.mxu0 0.0
    %1115 = vmatpush1.msra.mxu0 0.0
    %1116 = vmatprep.subr.mxu0 0.0
    %1117 = vmatpush1.msra.mxu0 0.0
    %1118 = vmatprep.subr.mxu0 0.0
    %1119 = vmatpush1.msra.mxu0 0.0
    %1120 = vmatprep.subr.mxu0 0.0
    %1121 = vmatpush1.msra.mxu0 0.0
    %1122 = vmatprep.subr.mxu0 0.0
    %1123 = vmatpush1.msra.mxu0 0.0
    %1124 = vmatprep.subr.mxu0 0.0
    %1125 = vmatpush1.msra.mxu0 0.0
    %1126 = vmatprep.subr.mxu0 0.0
    %1127 = vmatpush1.msra.mxu0 0.0
    %1128 = vmatprep.subr.mxu0 0.0
    %1129 = vmatpush1.msra.mxu0 0.0
    %1130 = vmatprep.subr.mxu0 0.0
    %1131 = vmatpush1.msra.mxu0 0.0
    %1132 = vmatprep.subr.mxu0 0.0
    %1133 = vmatpush1.msra.mxu0 0.0
    %1134 = vmatprep.subr.mxu0 0.0
    %1135 = vmatpush1.msra.mxu0 0.0
    %1136 = vmatprep.subr.mxu0 0.0
    %1137 = vmatpush1.msra.mxu0 0.0
    %1138 = vmatprep.subr.mxu0 0.0
    %1139 = vmatpush1.msra.mxu0 0.0
    %1140 = vmatprep.subr.mxu0 0.0
    %1141 = vmatpush1.msra.mxu0 0.0
    %1142 = vmatprep.subr.mxu0 0.0
    %1143 = vmatpush1.msra.mxu0 0.0
    %1144 = vmatprep.subr.mxu0 0.0
    %1145 = vmatpush1.msra.mxu0 0.0
    %1146 = vmatprep.subr.mxu0 0.0
    %1147 = vmatpush1.msra.mxu0 0.0
    %1148 = vmatprep.subr.mxu0 0.0
    %1149 = vmatpush1.msra.mxu0 0.0
    %1150 = vmatprep.subr.mxu0 0.0
    %1151 = vmatpush1.msra.mxu0 0.0
    %1152 = vmatprep.subr.mxu0 0.0
    %1153 = vmatpush1.msra.mxu0 0.0
    %1154 = vmatprep.subr.mxu0 0.0
    %1155 = vmatpush1.msra.mxu0 0.0
    %1156 = vmatprep.subr.mxu0 0.0
    %1157 = vmatpush1.msra.mxu0 0.0
    %1158 = vmatprep.subr.mxu0 0.0
    %1159 = vmatpush1.msra.mxu0 0.0
    %1160 = vmatprep.subr.mxu0 0.0
    %1161 = vmatpush1.msra.mxu0 0.0
    %1162 = vmatprep.subr.mxu0 0.0
    %1163 = vmatpush1.msra.mxu0 0.0
    %1164 = vmatprep.subr.mxu0 0.0
    %1165 = vmatpush1.msra.mxu0 0.0
    %1166 = vmatprep.subr.mxu0 0.0
    %1167 = vmatpush1.msra.mxu0 0.0
    %1168 = vmatprep.subr.mxu0 0.0
    %1169 = vmatpush1.msra.mxu0 0.0
    %1170 = vmatprep.subr.mxu0 0.0
    %1171 = vmatpush1.msra.mxu0 0.0
    %1172 = vmatprep.subr.mxu0 0.0
    %1173 = vmatpush1.msra.mxu0 0.0
    %1174 = vmatprep.mubr.f32.mxu0 0.0
    %1175 = vmatmul.mubr.f32.gmra.mrb[0].mxu0 %v1108
    %v1176 = vpop.f32.mrb[0].mxu0
    %v1177 = vadd.f32 %v1104, %v1176
    %v1178 = vpop.f32.mrb[0].mxu0
    %1179 = vdwg.mxu0
    %1180 = vst [vmem:[#allocation2] sm:$0xff] %v1177
    // Predicated region
    $region70: #{tpu_custom_call.1} parent=1 // pred_check
      _
    $region71: #{tpu_custom_call.1} parent=1 // pred_check_branch
      %1182 = sbr.rel (0) target = $region73
    $region72: #{tpu_custom_call.1} parent=1 // pred_region
      %s1184 = ssub.s32 128, 128
      %1185 = vsyncadd [#allocation3], %s1184
      %s1187 = sshll.u32 [#allocation2], 4
      %s1188 = int_to_ptr.vmem [resolvable:$true] %s1187
      %1190 = dma.vmem_to_hbm [thread:$0]  %s1188, 128, %s17, [#allocation3]
    $region73: #{tpu_custom_call.1} parent=1 // pred_fallthru
      _
    // Predicated region
    $region74: #{tpu_custom_call.1} parent=1 // pred_check
      _
    $region75: #{tpu_custom_call.1} parent=1 // pred_check_branch
      %1192 = sbr.rel (0) target = $region77
    $region76: #{tpu_custom_call.1} parent=1 // pred_region
      %1193 = dma.done [#allocation3], 128
    $region77: #{tpu_custom_call.1} parent=1 // pred_fallthru
      _
    %1194 = vsyncpa [#allocation3], 1

</llo_original>
